<compile_context>
chip_gen: v6e
topology: v6e:2x2x1
jax: 0.10.0
libtpu: 0.0.40
codegen_flags: <defaults>
</compile_context>

<pallas_src>
import functools

import jax
import jax.numpy as jnp
from jax.experimental import pallas as pl
from jax.experimental.pallas import tpu as pltpu

EPS = 1e-5


# ------------------------------- fused kernel ---------------------------------

def _se_block_kernel(x_ref, w1_ref, w2_ref, s1_ref, b1_ref, s2_ref, b2_ref,
                     fc1t_ref, fc2_ref, out_ref, cols_ref, *, H, W, C):
    """Fused SEBasicBlock forward for one batch element.

    x_ref    : (1, C, H*W) f32   input, channels on sublanes, pixels on lanes
    w1/w2    : (C, 9*C)    bf16  conv weights, w[co, (ky*3+kx)*C + ci]
    s*/b*    : (C, 1)      f32   folded BatchNorm scale / bias
    fc1t_ref : (C, Cmid)   f32   SE fc1 weight transposed (fc1t[c, m] = fc1_w[m, c])
    fc2_ref  : (C, Cmid)   f32   SE fc2 weight (PyTorch layout (C, Cmid))
    out_ref  : (1, C, H*W) f32
    cols_ref : (9*C, H*W)  bf16  VMEM scratch holding the im2col matrix
    """
    HW = H * W
    PAD = W + 1  # covers the largest flat-index shift (+-(W+1)) of a 3x3 tap

    # Pixel x-coordinate along the lane axis (hoisted; reused by both convs).
    px = jax.lax.broadcasted_iota(jnp.int32, (C, HW), 1) % W
    mask_left = px >= 1           # valid source for dx = 0  (x_s = x - 1 >= 0)
    mask_right = px <= (W - 2)    # valid source for dx = 2  (x_s = x + 1 <= W-1)

    def build_cols(img_bf16):
        # Zero-pad the flattened (C, HW) image along the lane axis.  Every 3x3 tap is then a
        # static lane slice: vertical padding is handled by the zeros, horizontal wrap-around
        # is masked per dx.
        zpad = jnp.zeros((C, PAD), jnp.bfloat16)
        xp = jnp.concatenate([zpad, img_bf16, zpad], axis=1)      # (C, HW + 2*PAD)
        for dy in range(3):
            for dx in range(3):
                tap = dy * 3 + dx
                s = (dy - 1) * W + (dx - 1)                       # flat-index shift of this tap
                patch = xp[:, PAD + s:PAD + s + HW]               # (C, HW) bf16
                if dx == 0:
                    patch = jnp.where(mask_left, patch, 0)
                elif dx == 2:
                    patch = jnp.where(mask_right, patch, 0)
                cols_ref[tap * C:(tap + 1) * C, :] = patch        # aligned sublane store

    def conv_bn(w_ref_, s_ref_, b_ref_):
        # One MXU matmul per conv: (C, 9C) bf16 @ (9C, HW) bf16 -> (C, HW) f32.
        acc = jnp.dot(w_ref_[...], cols_ref[...], preferred_element_type=jnp.float32)
        return acc * s_ref_[...] + b_ref_[...]                    # folded BatchNorm

    x = x_ref[0]                                                  # (C, HW) f32 identity

    # conv1 -> bn1 -> relu
    build_cols(x.astype(jnp.bfloat16))
    h = jnp.maximum(conv_bn(w1_ref, s1_ref, b1_ref), 0.0)

    # conv2 -> bn2
    build_cols(h.astype(jnp.bfloat16))
    out = conv_bn(w2_ref, s2_ref, b2_ref)

    # Squeeze-Excite: global average pool -> fc1 -> relu -> fc2 -> sigmoid -> channel gate.
    pooled = jnp.mean(out, axis=1, keepdims=True)                         # (C, 1)
    hid = jnp.sum(fc1t_ref[...] * pooled, axis=0, keepdims=True)          # (1, Cmid)
    hid = jnp.maximum(hid, 0.0)
    z = jnp.sum(fc2_ref[...] * hid, axis=1, keepdims=True)                # (C, 1)
    gate = pl.reciprocal(1.0 + jnp.exp(-z), approx=True)                  # sigmoid on EUP
    out = out * gate

    # residual add + final relu
    out = jnp.maximum(out + x, 0.0)
    out_ref[0] = out.astype(out_ref.dtype)


# --------------------------------- wrappers -----------------------------------

def prepare_params(p):
    """One-time parameter prep: fold BN, repack conv weights (OIHW -> (Cout, 9*Cin)) in bf16."""
    C = p['conv1_w'].shape[0]

    def pack_conv(w):  # (Cout, Cin, 3, 3) -> (Cout, (ky*3+kx)*Cin + ci)
        cin = w.shape[1]
        return jnp.transpose(w, (0, 2, 3, 1)).reshape(w.shape[0], 9 * cin).astype(jnp.bfloat16)

    def fold_bn(gamma, beta, mean, var):
        s = gamma / jnp.sqrt(var + EPS)
        return s.reshape(C, 1), (beta - mean * s).reshape(C, 1)

    s1, b1 = fold_bn(p['bn1_gamma'], p['bn1_beta'], p['bn1_mean'], p['bn1_var'])
    s2, b2 = fold_bn(p['bn2_gamma'], p['bn2_beta'], p['bn2_mean'], p['bn2_var'])
    return {
        'w1': pack_conv(p['conv1_w']),
        'w2': pack_conv(p['conv2_w']),
        's1': s1, 'b1': b1, 's2': s2, 'b2': b2,
        'fc1t': p['fc1_w'].T,     # (C, Cmid)
        'fc2': p['fc2_w'],        # (C, Cmid)
    }


def se_basic_block_forward(x_nchw, prep):
    """SEBasicBlock.forward (stride=1, downsample=None). x_nchw: (N, C, H, W) f32 -> same shape."""
    N, C, H, W = x_nchw.shape
    HW = H * W
    Cmid = prep['fc1t'].shape[1]
    x = x_nchw.reshape(N, C, HW)          # free reshape; (C, HW) layout is already lane-dense

    kern = functools.partial(_se_block_kernel, H=H, W=W, C=C)
    out = pl.pallas_call(
        kern,
        out_shape=jax.ShapeDtypeStruct((N, C, HW), jnp.float32),
        grid=(N,),
        in_specs=[
            pl.BlockSpec((1, C, HW), lambda n: (n, 0, 0)),     # x (identity + conv1 input)
            pl.BlockSpec((C, 9 * C), lambda n: (0, 0)),        # w1
            pl.BlockSpec((C, 9 * C), lambda n: (0, 0)),        # w2
            pl.BlockSpec((C, 1), lambda n: (0, 0)),            # bn1 scale
            pl.BlockSpec((C, 1), lambda n: (0, 0)),            # bn1 bias
            pl.BlockSpec((C, 1), lambda n: (0, 0)),            # bn2 scale
            pl.BlockSpec((C, 1), lambda n: (0, 0)),            # bn2 bias
            pl.BlockSpec((C, Cmid), lambda n: (0, 0)),         # fc1 (transposed)
            pl.BlockSpec((C, Cmid), lambda n: (0, 0)),         # fc2
        ],
        out_specs=pl.BlockSpec((1, C, HW), lambda n: (n, 0, 0)),
        scratch_shapes=[pltpu.VMEM((9 * C, HW), jnp.bfloat16)],  # im2col scratch
        compiler_params=pltpu.CompilerParams(dimension_semantics=("parallel",)),
    )(x, prep['w1'], prep['w2'], prep['s1'], prep['b1'],
      prep['s2'], prep['b2'], prep['fc1t'], prep['fc2'])
    return out.reshape(N, C, H, W)


# ----------------------------- pure-JAX reference ------------------------------

def _ref_forward(x, p):
    hp = jax.lax.Precision.HIGHEST

    def conv(x, w):
        return jax.lax.conv_general_dilated(
            x, w, (1, 1), ((1, 1), (1, 1)),
            dimension_numbers=('NCHW', 'OIHW', 'NCHW'), precision=hp)

    def bn(x, g, b, m, v):
        sh = lambda a: a[None, :, None, None]
        return (x - sh(m)) / jnp.sqrt(sh(v) + EPS) * sh(g) + sh(b)

    out = jax.nn.relu(bn(conv(x, p['conv1_w']),
                         p['bn1_gamma'], p['bn1_beta'], p['bn1_mean'], p['bn1_var']))
    out = bn(conv(out, p['conv2_w']),
             p['bn2_gamma'], p['bn2_beta'], p['bn2_mean'], p['bn2_var'])
    y = jnp.mean(out, axis=(2, 3))
    y = jax.nn.relu(y @ p['fc1_w'].T)
    y = jax.nn.sigmoid(y @ p['fc2_w'].T)
    out = out * y[:, :, None, None]
    return jax.nn.relu(out + x)


# ------------------------------------ main --------------------------------------

if __name__ == "__main__":
    N, C, H, W = 2, 32, 16, 16          # inplanes = planes = 32, stride = 1
    reduction = 16
    Cmid = C // reduction

    ks = jax.random.split(jax.random.PRNGKey(0), 12)
    params = {
        'conv1_w': 0.05 * jax.random.normal(ks[0], (C, C, 3, 3), jnp.float32),
        'conv2_w': 0.05 * jax.random.normal(ks[1], (C, C, 3, 3), jnp.float32),
        'bn1_gamma': 1.0 + 0.1 * jax.random.normal(ks[2], (C,), jnp.float32),
        'bn1_beta': 0.1 * jax.random.normal(ks[3], (C,), jnp.float32),
        'bn1_mean': 0.1 * jax.random.normal(ks[4], (C,), jnp.float32),
        'bn1_var': jax.random.uniform(ks[5], (C,), jnp.float32, 0.5, 1.5),
        'bn2_gamma': 1.0 + 0.1 * jax.random.normal(ks[6], (C,), jnp.float32),
        'bn2_beta': 0.1 * jax.random.normal(ks[7], (C,), jnp.float32),
        'bn2_mean': 0.1 * jax.random.normal(ks[8], (C,), jnp.float32),
        'bn2_var': jax.random.uniform(ks[9], (C,), jnp.float32, 0.5, 1.5),
        'fc1_w': 0.1 * jax.random.normal(ks[10], (Cmid, C), jnp.float32),
        'fc2_w': 0.1 * jax.random.normal(ks[11], (C, Cmid), jnp.float32),
    }
    x = jax.random.normal(jax.random.PRNGKey(1), (N, C, H, W), jnp.float32)

    prep = prepare_params(params)                 # hoisted: done once, not per forward call
    fwd = jax.jit(se_basic_block_forward)

    out = fwd(x, prep)
    jax.block_until_ready(out)

    ref = _ref_forward(x, params)
    err = float(jnp.max(jnp.abs(out - ref)))
    assert out.shape == (N, C, H, W) and err < 5e-2, f"mismatch: max abs err = {err}"
    print("KERNEL_OK")
</pallas_src>

<mosaic_0001>
module attributes {stable_mosaic.version = 11 : i64} {
  func.func @_se_block_kernel(%arg0: i32, %arg1: memref<1x32x256xf32, #tpu.memory_space<vmem>>, %arg2: memref<32x288xbf16, #tpu.memory_space<vmem>>, %arg3: memref<32x288xbf16, #tpu.memory_space<vmem>>, %arg4: memref<32x1xf32, #tpu.memory_space<vmem>>, %arg5: memref<32x1xf32, #tpu.memory_space<vmem>>, %arg6: memref<32x1xf32, #tpu.memory_space<vmem>>, %arg7: memref<32x1xf32, #tpu.memory_space<vmem>>, %arg8: memref<32x2xf32, #tpu.memory_space<vmem>>, %arg9: memref<32x2xf32, #tpu.memory_space<vmem>>, %arg10: memref<1x32x256xf32, #tpu.memory_space<vmem>>, %arg11: memref<288x256xbf16, #tpu.memory_space<vmem>>) attributes {dimension_semantics = [#tpu.dimension_semantics<parallel>], iteration_bounds = array<i64: 2>, scalar_prefetch = 0 : i64, scratch_operands = 1 : i64, tpu.core_type = #tpu.core_type<tc>, window_params = [{transform_indices = @transform_0, window_bounds = array<i64: 1, 32, 256>}, {pipeline_mode = #tpu.pipeline_mode<synchronous>, transform_indices = @transform_1, window_bounds = array<i64: 32, 288>}, {pipeline_mode = #tpu.pipeline_mode<synchronous>, transform_indices = @transform_2, window_bounds = array<i64: 32, 288>}, {pipeline_mode = #tpu.pipeline_mode<synchronous>, transform_indices = @transform_3, window_bounds = array<i64: 32, 1>}, {pipeline_mode = #tpu.pipeline_mode<synchronous>, transform_indices = @transform_4, window_bounds = array<i64: 32, 1>}, {pipeline_mode = #tpu.pipeline_mode<synchronous>, transform_indices = @transform_5, window_bounds = array<i64: 32, 1>}, {pipeline_mode = #tpu.pipeline_mode<synchronous>, transform_indices = @transform_6, window_bounds = array<i64: 32, 1>}, {pipeline_mode = #tpu.pipeline_mode<synchronous>, transform_indices = @transform_7, window_bounds = array<i64: 32, 2>}, {pipeline_mode = #tpu.pipeline_mode<synchronous>, transform_indices = @transform_8, window_bounds = array<i64: 32, 2>}, {transform_indices = @transform_9, window_bounds = array<i64: 1, 32, 256>}]} {
    %0 = tpu.iota {dimensions = array<i32: 1>} : vector<32x256xi32>
    %c16_i32 = arith.constant 16 : i32
    %c0_i32 = arith.constant 0 : i32
    %1 = arith.cmpi eq, %c16_i32, %c0_i32 : i32
    %c1_i32 = arith.constant 1 : i32
    %2 = arith.select %1, %c1_i32, %c16_i32 : i32
    %3 = vector.broadcast %2 : i32 to vector<32x256xi32>
    %4 = arith.remsi %0, %3 : vector<32x256xi32>
    %c0_i32_0 = arith.constant 0 : i32
    %5 = vector.broadcast %c0_i32_0 : i32 to vector<32x256xi32>
    %6 = arith.cmpi ne, %4, %5 : vector<32x256xi32>
    %c0_i32_1 = arith.constant 0 : i32
    %7 = vector.broadcast %c0_i32_1 : i32 to vector<32x256xi32>
    %8 = arith.cmpi slt, %4, %7 : vector<32x256xi32>
    %c0_i32_2 = arith.constant 0 : i32
    %9 = arith.cmpi slt, %2, %c0_i32_2 : i32
    %10 = vector.broadcast %9 : i1 to vector<32x256xi1>
    %11 = vector.broadcast %10 : vector<32x256xi1> to vector<32x256xi1>
    %12 = arith.xori %8, %11 : vector<32x256xi1>
    %13 = arith.andi %12, %6 : vector<32x256xi1>
    %14 = vector.broadcast %2 : i32 to vector<32x256xi32>
    %15 = arith.addi %4, %14 : vector<32x256xi32>
    %16 = arith.select %13, %15, %4 : vector<32x256xi1>, vector<32x256xi32>
    %c1_i32_3 = arith.constant 1 : i32
    %17 = vector.broadcast %c1_i32_3 : i32 to vector<32x256xi32>
    %18 = arith.cmpi sge, %16, %17 : vector<32x256xi32>
    %c14_i32 = arith.constant 14 : i32
    %19 = vector.broadcast %c14_i32 : i32 to vector<32x256xi32>
    %20 = arith.cmpi sle, %16, %19 : vector<32x256xi32>
    %c0 = arith.constant 0 : index
    %c0_4 = arith.constant 0 : index
    %c0_5 = arith.constant 0 : index
    %21 = vector.load %arg1[%c0, %c0_4, %c0_5] : memref<1x32x256xf32, #tpu.memory_space<vmem>>, vector<1x32x256xf32>
    %22 = vector.shape_cast %21 : vector<1x32x256xf32> to vector<32x256xf32>
    %23 = arith.truncf %22 : vector<32x256xf32> to vector<32x256xbf16>
    %cst = arith.constant 0.000000e+00 : bf16
    %24 = vector.broadcast %cst : bf16 to vector<32x17xbf16>
    %25 = tpu.concatenate %24, %23, %24 in 1 : vector<32x17xbf16>, vector<32x256xbf16>, vector<32x17xbf16> -> vector<32x290xbf16>
    %26 = vector.extract_strided_slice %25 {offsets = [0, 0], sizes = [32, 256], strides = [1, 1]} : vector<32x290xbf16> to vector<32x256xbf16>
    %c0_i32_6 = arith.constant 0 : i32
    %27 = arith.sitofp %c0_i32_6 : i32 to bf16
    %28 = vector.broadcast %27 : bf16 to vector<32x256xbf16>
    %29 = arith.select %18, %26, %28 : vector<32x256xi1>, vector<32x256xbf16>
    %c0_7 = arith.constant 0 : index
    %c0_8 = arith.constant 0 : index
    %30 = vector.load %arg11[%c0_7, %c0_8] : memref<288x256xbf16, #tpu.memory_space<vmem>>, vector<32x256xbf16>
    tpu.vector_store %arg11[%c0_7, %c0_8], %29 {strides = array<i32>} : memref<288x256xbf16, #tpu.memory_space<vmem>>, vector<32x256xbf16>,
    %31 = vector.extract_strided_slice %25 {offsets = [0, 1], sizes = [32, 256], strides = [1, 1]} : vector<32x290xbf16> to vector<32x256xbf16>
    %c32 = arith.constant 32 : index
    %c0_9 = arith.constant 0 : index
    %32 = vector.load %arg11[%c32, %c0_9] : memref<288x256xbf16, #tpu.memory_space<vmem>>, vector<32x256xbf16>
    tpu.vector_store %arg11[%c32, %c0_9], %31 {strides = array<i32>} : memref<288x256xbf16, #tpu.memory_space<vmem>>, vector<32x256xbf16>,
    %33 = vector.extract_strided_slice %25 {offsets = [0, 2], sizes = [32, 256], strides = [1, 1]} : vector<32x290xbf16> to vector<32x256xbf16>
    %c0_i32_10 = arith.constant 0 : i32
    %34 = arith.sitofp %c0_i32_10 : i32 to bf16
    %35 = vector.broadcast %34 : bf16 to vector<32x256xbf16>
    %36 = arith.select %20, %33, %35 : vector<32x256xi1>, vector<32x256xbf16>
    %c64 = arith.constant 64 : index
    %c0_11 = arith.constant 0 : index
    %37 = vector.load %arg11[%c64, %c0_11] : memref<288x256xbf16, #tpu.memory_space<vmem>>, vector<32x256xbf16>
    tpu.vector_store %arg11[%c64, %c0_11], %36 {strides = array<i32>} : memref<288x256xbf16, #tpu.memory_space<vmem>>, vector<32x256xbf16>,
    %38 = vector.extract_strided_slice %25 {offsets = [0, 16], sizes = [32, 256], strides = [1, 1]} : vector<32x290xbf16> to vector<32x256xbf16>
    %c0_i32_12 = arith.constant 0 : i32
    %39 = arith.sitofp %c0_i32_12 : i32 to bf16
    %40 = vector.broadcast %39 : bf16 to vector<32x256xbf16>
    %41 = arith.select %18, %38, %40 : vector<32x256xi1>, vector<32x256xbf16>
    %c96 = arith.constant 96 : index
    %c0_13 = arith.constant 0 : index
    %42 = vector.load %arg11[%c96, %c0_13] : memref<288x256xbf16, #tpu.memory_space<vmem>>, vector<32x256xbf16>
    tpu.vector_store %arg11[%c96, %c0_13], %41 {strides = array<i32>} : memref<288x256xbf16, #tpu.memory_space<vmem>>, vector<32x256xbf16>,
    %43 = vector.extract_strided_slice %25 {offsets = [0, 17], sizes = [32, 256], strides = [1, 1]} : vector<32x290xbf16> to vector<32x256xbf16>
    %c128 = arith.constant 128 : index
    %c0_14 = arith.constant 0 : index
    %44 = vector.load %arg11[%c128, %c0_14] : memref<288x256xbf16, #tpu.memory_space<vmem>>, vector<32x256xbf16>
    tpu.vector_store %arg11[%c128, %c0_14], %43 {strides = array<i32>} : memref<288x256xbf16, #tpu.memory_space<vmem>>, vector<32x256xbf16>,
    %45 = vector.extract_strided_slice %25 {offsets = [0, 18], sizes = [32, 256], strides = [1, 1]} : vector<32x290xbf16> to vector<32x256xbf16>
    %c0_i32_15 = arith.constant 0 : i32
    %46 = arith.sitofp %c0_i32_15 : i32 to bf16
    %47 = vector.broadcast %46 : bf16 to vector<32x256xbf16>
    %48 = arith.select %20, %45, %47 : vector<32x256xi1>, vector<32x256xbf16>
    %c160 = arith.constant 160 : index
    %c0_16 = arith.constant 0 : index
    %49 = vector.load %arg11[%c160, %c0_16] : memref<288x256xbf16, #tpu.memory_space<vmem>>, vector<32x256xbf16>
    tpu.vector_store %arg11[%c160, %c0_16], %48 {strides = array<i32>} : memref<288x256xbf16, #tpu.memory_space<vmem>>, vector<32x256xbf16>,
    %50 = vector.extract_strided_slice %25 {offsets = [0, 32], sizes = [32, 256], strides = [1, 1]} : vector<32x290xbf16> to vector<32x256xbf16>
    %c0_i32_17 = arith.constant 0 : i32
    %51 = arith.sitofp %c0_i32_17 : i32 to bf16
    %52 = vector.broadcast %51 : bf16 to vector<32x256xbf16>
    %53 = arith.select %18, %50, %52 : vector<32x256xi1>, vector<32x256xbf16>
    %c192 = arith.constant 192 : index
    %c0_18 = arith.constant 0 : index
    %54 = vector.load %arg11[%c192, %c0_18] : memref<288x256xbf16, #tpu.memory_space<vmem>>, vector<32x256xbf16>
    tpu.vector_store %arg11[%c192, %c0_18], %53 {strides = array<i32>} : memref<288x256xbf16, #tpu.memory_space<vmem>>, vector<32x256xbf16>,
    %55 = vector.extract_strided_slice %25 {offsets = [0, 33], sizes = [32, 256], strides = [1, 1]} : vector<32x290xbf16> to vector<32x256xbf16>
    %c224 = arith.constant 224 : index
    %c0_19 = arith.constant 0 : index
    %56 = vector.load %arg11[%c224, %c0_19] : memref<288x256xbf16, #tpu.memory_space<vmem>>, vector<32x256xbf16>
    tpu.vector_store %arg11[%c224, %c0_19], %55 {strides = array<i32>} : memref<288x256xbf16, #tpu.memory_space<vmem>>, vector<32x256xbf16>,
    %57 = vector.extract_strided_slice %25 {offsets = [0, 34], sizes = [32, 256], strides = [1, 1]} : vector<32x290xbf16> to vector<32x256xbf16>
    %c0_i32_20 = arith.constant 0 : i32
    %58 = arith.sitofp %c0_i32_20 : i32 to bf16
    %59 = vector.broadcast %58 : bf16 to vector<32x256xbf16>
    %60 = arith.select %20, %57, %59 : vector<32x256xi1>, vector<32x256xbf16>
    %c256 = arith.constant 256 : index
    %c0_21 = arith.constant 0 : index
    %61 = vector.load %arg11[%c256, %c0_21] : memref<288x256xbf16, #tpu.memory_space<vmem>>, vector<32x256xbf16>
    tpu.vector_store %arg11[%c256, %c0_21], %60 {strides = array<i32>} : memref<288x256xbf16, #tpu.memory_space<vmem>>, vector<32x256xbf16>,
    %c0_22 = arith.constant 0 : index
    %c0_23 = arith.constant 0 : index
    %62 = vector.load %arg2[%c0_22, %c0_23] : memref<32x288xbf16, #tpu.memory_space<vmem>>, vector<32x288xbf16>
    %c0_24 = arith.constant 0 : index
    %c0_25 = arith.constant 0 : index
    %63 = vector.load %arg11[%c0_24, %c0_25] : memref<288x256xbf16, #tpu.memory_space<vmem>>, vector<288x256xbf16>
    %cst_26 = arith.constant dense<0.000000e+00> : vector<32x256xf32>
    %64 = tpu.matmul %62, %63, %cst_26 {dimension_numbers = #tpu.dot_dimension_numbers<[1], [0], [0], [1], [0, 0, 1, 1], [], []>} : vector<32x288xbf16>, vector<288x256xbf16>, vector<32x256xf32> -> vector<32x256xf32>
    %c0_27 = arith.constant 0 : index
    %c0_28 = arith.constant 0 : index
    %65 = vector.load %arg4[%c0_27, %c0_28] : memref<32x1xf32, #tpu.memory_space<vmem>>, vector<32x1xf32>
    %66 = vector.broadcast %65 : vector<32x1xf32> to vector<32x256xf32>
    %67 = arith.mulf %64, %66 : vector<32x256xf32>
    %c0_29 = arith.constant 0 : index
    %c0_30 = arith.constant 0 : index
    %68 = vector.load %arg5[%c0_29, %c0_30] : memref<32x1xf32, #tpu.memory_space<vmem>>, vector<32x1xf32>
    %69 = vector.broadcast %68 : vector<32x1xf32> to vector<32x256xf32>
    %70 = arith.addf %67, %69 : vector<32x256xf32>
    %cst_31 = arith.constant 0.000000e+00 : f32
    %71 = vector.broadcast %cst_31 : f32 to vector<32x256xf32>
    %72 = arith.maximumf %70, %71 : vector<32x256xf32>
    %73 = arith.truncf %72 : vector<32x256xf32> to vector<32x256xbf16>
    %cst_32 = arith.constant 0.000000e+00 : bf16
    %74 = vector.broadcast %cst_32 : bf16 to vector<32x17xbf16>
    %75 = tpu.concatenate %74, %73, %74 in 1 : vector<32x17xbf16>, vector<32x256xbf16>, vector<32x17xbf16> -> vector<32x290xbf16>
    %76 = vector.extract_strided_slice %75 {offsets = [0, 0], sizes = [32, 256], strides = [1, 1]} : vector<32x290xbf16> to vector<32x256xbf16>
    %c0_i32_33 = arith.constant 0 : i32
    %77 = arith.sitofp %c0_i32_33 : i32 to bf16
    %78 = vector.broadcast %77 : bf16 to vector<32x256xbf16>
    %79 = arith.select %18, %76, %78 : vector<32x256xi1>, vector<32x256xbf16>
    %c0_34 = arith.constant 0 : index
    %c0_35 = arith.constant 0 : index
    %80 = vector.load %arg11[%c0_34, %c0_35] : memref<288x256xbf16, #tpu.memory_space<vmem>>, vector<32x256xbf16>
    tpu.vector_store %arg11[%c0_34, %c0_35], %79 {strides = array<i32>} : memref<288x256xbf16, #tpu.memory_space<vmem>>, vector<32x256xbf16>,
    %81 = vector.extract_strided_slice %75 {offsets = [0, 1], sizes = [32, 256], strides = [1, 1]} : vector<32x290xbf16> to vector<32x256xbf16>
    %c32_36 = arith.constant 32 : index
    %c0_37 = arith.constant 0 : index
    %82 = vector.load %arg11[%c32_36, %c0_37] : memref<288x256xbf16, #tpu.memory_space<vmem>>, vector<32x256xbf16>
    tpu.vector_store %arg11[%c32_36, %c0_37], %81 {strides = array<i32>} : memref<288x256xbf16, #tpu.memory_space<vmem>>, vector<32x256xbf16>,
    %83 = vector.extract_strided_slice %75 {offsets = [0, 2], sizes = [32, 256], strides = [1, 1]} : vector<32x290xbf16> to vector<32x256xbf16>
    %c0_i32_38 = arith.constant 0 : i32
    %84 = arith.sitofp %c0_i32_38 : i32 to bf16
    %85 = vector.broadcast %84 : bf16 to vector<32x256xbf16>
    %86 = arith.select %20, %83, %85 : vector<32x256xi1>, vector<32x256xbf16>
    %c64_39 = arith.constant 64 : index
    %c0_40 = arith.constant 0 : index
    %87 = vector.load %arg11[%c64_39, %c0_40] : memref<288x256xbf16, #tpu.memory_space<vmem>>, vector<32x256xbf16>
    tpu.vector_store %arg11[%c64_39, %c0_40], %86 {strides = array<i32>} : memref<288x256xbf16, #tpu.memory_space<vmem>>, vector<32x256xbf16>,
    %88 = vector.extract_strided_slice %75 {offsets = [0, 16], sizes = [32, 256], strides = [1, 1]} : vector<32x290xbf16> to vector<32x256xbf16>
    %c0_i32_41 = arith.constant 0 : i32
    %89 = arith.sitofp %c0_i32_41 : i32 to bf16
    %90 = vector.broadcast %89 : bf16 to vector<32x256xbf16>
    %91 = arith.select %18, %88, %90 : vector<32x256xi1>, vector<32x256xbf16>
    %c96_42 = arith.constant 96 : index
    %c0_43 = arith.constant 0 : index
    %92 = vector.load %arg11[%c96_42, %c0_43] : memref<288x256xbf16, #tpu.memory_space<vmem>>, vector<32x256xbf16>
    tpu.vector_store %arg11[%c96_42, %c0_43], %91 {strides = array<i32>} : memref<288x256xbf16, #tpu.memory_space<vmem>>, vector<32x256xbf16>,
    %93 = vector.extract_strided_slice %75 {offsets = [0, 17], sizes = [32, 256], strides = [1, 1]} : vector<32x290xbf16> to vector<32x256xbf16>
    %c128_44 = arith.constant 128 : index
    %c0_45 = arith.constant 0 : index
    %94 = vector.load %arg11[%c128_44, %c0_45] : memref<288x256xbf16, #tpu.memory_space<vmem>>, vector<32x256xbf16>
    tpu.vector_store %arg11[%c128_44, %c0_45], %93 {strides = array<i32>} : memref<288x256xbf16, #tpu.memory_space<vmem>>, vector<32x256xbf16>,
    %95 = vector.extract_strided_slice %75 {offsets = [0, 18], sizes = [32, 256], strides = [1, 1]} : vector<32x290xbf16> to vector<32x256xbf16>
    %c0_i32_46 = arith.constant 0 : i32
    %96 = arith.sitofp %c0_i32_46 : i32 to bf16
    %97 = vector.broadcast %96 : bf16 to vector<32x256xbf16>
    %98 = arith.select %20, %95, %97 : vector<32x256xi1>, vector<32x256xbf16>
    %c160_47 = arith.constant 160 : index
    %c0_48 = arith.constant 0 : index
    %99 = vector.load %arg11[%c160_47, %c0_48] : memref<288x256xbf16, #tpu.memory_space<vmem>>, vector<32x256xbf16>
    tpu.vector_store %arg11[%c160_47, %c0_48], %98 {strides = array<i32>} : memref<288x256xbf16, #tpu.memory_space<vmem>>, vector<32x256xbf16>,
    %100 = vector.extract_strided_slice %75 {offsets = [0, 32], sizes = [32, 256], strides = [1, 1]} : vector<32x290xbf16> to vector<32x256xbf16>
    %c0_i32_49 = arith.constant 0 : i32
    %101 = arith.sitofp %c0_i32_49 : i32 to bf16
    %102 = vector.broadcast %101 : bf16 to vector<32x256xbf16>
    %103 = arith.select %18, %100, %102 : vector<32x256xi1>, vector<32x256xbf16>
    %c192_50 = arith.constant 192 : index
    %c0_51 = arith.constant 0 : index
    %104 = vector.load %arg11[%c192_50, %c0_51] : memref<288x256xbf16, #tpu.memory_space<vmem>>, vector<32x256xbf16>
    tpu.vector_store %arg11[%c192_50, %c0_51], %103 {strides = array<i32>} : memref<288x256xbf16, #tpu.memory_space<vmem>>, vector<32x256xbf16>,
    %105 = vector.extract_strided_slice %75 {offsets = [0, 33], sizes = [32, 256], strides = [1, 1]} : vector<32x290xbf16> to vector<32x256xbf16>
    %c224_52 = arith.constant 224 : index
    %c0_53 = arith.constant 0 : index
    %106 = vector.load %arg11[%c224_52, %c0_53] : memref<288x256xbf16, #tpu.memory_space<vmem>>, vector<32x256xbf16>
    tpu.vector_store %arg11[%c224_52, %c0_53], %105 {strides = array<i32>} : memref<288x256xbf16, #tpu.memory_space<vmem>>, vector<32x256xbf16>,
    %107 = vector.extract_strided_slice %75 {offsets = [0, 34], sizes = [32, 256], strides = [1, 1]} : vector<32x290xbf16> to vector<32x256xbf16>
    %c0_i32_54 = arith.constant 0 : i32
    %108 = arith.sitofp %c0_i32_54 : i32 to bf16
    %109 = vector.broadcast %108 : bf16 to vector<32x256xbf16>
    %110 = arith.select %20, %107, %109 : vector<32x256xi1>, vector<32x256xbf16>
    %c256_55 = arith.constant 256 : index
    %c0_56 = arith.constant 0 : index
    %111 = vector.load %arg11[%c256_55, %c0_56] : memref<288x256xbf16, #tpu.memory_space<vmem>>, vector<32x256xbf16>
    tpu.vector_store %arg11[%c256_55, %c0_56], %110 {strides = array<i32>} : memref<288x256xbf16, #tpu.memory_space<vmem>>, vector<32x256xbf16>,
    %c0_57 = arith.constant 0 : index
    %c0_58 = arith.constant 0 : index
    %112 = vector.load %arg3[%c0_57, %c0_58] : memref<32x288xbf16, #tpu.memory_space<vmem>>, vector<32x288xbf16>
    %c0_59 = arith.constant 0 : index
    %c0_60 = arith.constant 0 : index
    %113 = vector.load %arg11[%c0_59, %c0_60] : memref<288x256xbf16, #tpu.memory_space<vmem>>, vector<288x256xbf16>
    %cst_61 = arith.constant dense<0.000000e+00> : vector<32x256xf32>
    %114 = tpu.matmul %112, %113, %cst_61 {dimension_numbers = #tpu.dot_dimension_numbers<[1], [0], [0], [1], [0, 0, 1, 1], [], []>} : vector<32x288xbf16>, vector<288x256xbf16>, vector<32x256xf32> -> vector<32x256xf32>
    %c0_62 = arith.constant 0 : index
    %c0_63 = arith.constant 0 : index
    %115 = vector.load %arg6[%c0_62, %c0_63] : memref<32x1xf32, #tpu.memory_space<vmem>>, vector<32x1xf32>
    %116 = vector.broadcast %115 : vector<32x1xf32> to vector<32x256xf32>
    %117 = arith.mulf %114, %116 : vector<32x256xf32>
    %c0_64 = arith.constant 0 : index
    %c0_65 = arith.constant 0 : index
    %118 = vector.load %arg7[%c0_64, %c0_65] : memref<32x1xf32, #tpu.memory_space<vmem>>, vector<32x1xf32>
    %119 = vector.broadcast %118 : vector<32x1xf32> to vector<32x256xf32>
    %120 = arith.addf %117, %119 : vector<32x256xf32>
    %cst_66 = arith.constant dense<0.000000e+00> : vector<32xf32>
    %121 = vector.multi_reduction <add>, %120, %cst_66 [1] : vector<32x256xf32> to vector<32xf32>
    %122 = vector.shape_cast %121 : vector<32xf32> to vector<32x1xf32>
    %cst_67 = arith.constant 2.560000e+02 : f32
    %123 = vector.broadcast %cst_67 : f32 to vector<32x1xf32>
    %124 = arith.divf %122, %123 : vector<32x1xf32>
    %c0_68 = arith.constant 0 : index
    %c0_69 = arith.constant 0 : index
    %125 = vector.load %arg8[%c0_68, %c0_69] : memref<32x2xf32, #tpu.memory_space<vmem>>, vector<32x2xf32>
    %126 = vector.broadcast %124 : vector<32x1xf32> to vector<32x2xf32>
    %127 = arith.mulf %125, %126 : vector<32x2xf32>
    %cst_70 = arith.constant dense<0.000000e+00> : vector<2xf32>
    %128 = vector.multi_reduction <add>, %127, %cst_70 [0] : vector<32x2xf32> to vector<2xf32>
    %129 = vector.shape_cast %128 : vector<2xf32> to vector<1x2xf32>
    %cst_71 = arith.constant 0.000000e+00 : f32
    %130 = vector.broadcast %cst_71 : f32 to vector<1x2xf32>
    %131 = arith.maximumf %129, %130 : vector<1x2xf32>
    %c0_72 = arith.constant 0 : index
    %c0_73 = arith.constant 0 : index
    %132 = vector.load %arg9[%c0_72, %c0_73] : memref<32x2xf32, #tpu.memory_space<vmem>>, vector<32x2xf32>
    %133 = vector.broadcast %131 : vector<1x2xf32> to vector<32x2xf32>
    %134 = arith.mulf %132, %133 : vector<32x2xf32>
    %cst_74 = arith.constant dense<0.000000e+00> : vector<32xf32>
    %135 = vector.multi_reduction <add>, %134, %cst_74 [1] : vector<32x2xf32> to vector<32xf32>
    %136 = vector.shape_cast %135 : vector<32xf32> to vector<32x1xf32>
    %cst_75 = arith.constant 0.000000e+00 : f32
    %137 = vector.broadcast %cst_75 : f32 to vector<32x1xf32>
    %138 = arith.subf %137, %136 : vector<32x1xf32>
    %139 = math.exp %138 : vector<32x1xf32>
    %cst_76 = arith.constant 1.000000e+00 : f32
    %140 = vector.broadcast %cst_76 : f32 to vector<32x1xf32>
    %141 = arith.addf %140, %139 : vector<32x1xf32>
    %142 = tpu.reciprocal %141 {approx = true} : vector<32x1xf32> -> vector<32x1xf32>
    %143 = vector.broadcast %142 : vector<32x1xf32> to vector<32x256xf32>
    %144 = arith.mulf %120, %143 : vector<32x256xf32>
    %145 = arith.addf %144, %22 : vector<32x256xf32>
    %cst_77 = arith.constant 0.000000e+00 : f32
    %146 = vector.broadcast %cst_77 : f32 to vector<32x256xf32>
    %147 = arith.maximumf %145, %146 : vector<32x256xf32>
    %c0_78 = arith.constant 0 : index
    %c0_79 = arith.constant 0 : index
    %c0_80 = arith.constant 0 : index
    %148 = vector.load %arg10[%c0_78, %c0_79, %c0_80] : memref<1x32x256xf32, #tpu.memory_space<vmem>>, vector<1x32x256xf32>
    %149 = vector.shape_cast %148 : vector<1x32x256xf32> to vector<32x256xf32>
    %150 = vector.shape_cast %147 : vector<32x256xf32> to vector<1x32x256xf32>
    tpu.vector_store %arg10[%c0_78, %c0_79, %c0_80], %150 {strides = array<i32>} : memref<1x32x256xf32, #tpu.memory_space<vmem>>, vector<1x32x256xf32>,
    return
  }
  func.func @transform_0(%arg0: i32) -> (i32, i32, i32) {
    %c0_i32 = arith.constant 0 : i32
    %c0_i32_0 = arith.constant 0 : i32
    %c0_i32_1 = arith.constant 0 : i32
    return %arg0, %c0_i32, %c0_i32_0 : i32, i32, i32
  }
  func.func @transform_1(%arg0: i32) -> (i32, i32) {
    %c0_i32 = arith.constant 0 : i32
    %c0_i32_0 = arith.constant 0 : i32
    %c0_i32_1 = arith.constant 0 : i32
    return %c0_i32, %c0_i32_0 : i32, i32
  }
  func.func @transform_2(%arg0: i32) -> (i32, i32) {
    %c0_i32 = arith.constant 0 : i32
    %c0_i32_0 = arith.constant 0 : i32
    %c0_i32_1 = arith.constant 0 : i32
    return %c0_i32, %c0_i32_0 : i32, i32
  }
  func.func @transform_3(%arg0: i32) -> (i32, i32) {
    %c0_i32 = arith.constant 0 : i32
    %c0_i32_0 = arith.constant 0 : i32
    %c0_i32_1 = arith.constant 0 : i32
    return %c0_i32, %c0_i32_0 : i32, i32
  }
  func.func @transform_4(%arg0: i32) -> (i32, i32) {
    %c0_i32 = arith.constant 0 : i32
    %c0_i32_0 = arith.constant 0 : i32
    %c0_i32_1 = arith.constant 0 : i32
    return %c0_i32, %c0_i32_0 : i32, i32
  }
  func.func @transform_5(%arg0: i32) -> (i32, i32) {
    %c0_i32 = arith.constant 0 : i32
    %c0_i32_0 = arith.constant 0 : i32
    %c0_i32_1 = arith.constant 0 : i32
    return %c0_i32, %c0_i32_0 : i32, i32
  }
  func.func @transform_6(%arg0: i32) -> (i32, i32) {
    %c0_i32 = arith.constant 0 : i32
    %c0_i32_0 = arith.constant 0 : i32
    %c0_i32_1 = arith.constant 0 : i32
    return %c0_i32, %c0_i32_0 : i32, i32
  }
  func.func @transform_7(%arg0: i32) -> (i32, i32) {
    %c0_i32 = arith.constant 0 : i32
    %c0_i32_0 = arith.constant 0 : i32
    %c0_i32_1 = arith.constant 0 : i32
    return %c0_i32, %c0_i32_0 : i32, i32
  }
  func.func @transform_8(%arg0: i32) -> (i32, i32) {
    %c0_i32 = arith.constant 0 : i32
    %c0_i32_0 = arith.constant 0 : i32
    %c0_i32_1 = arith.constant 0 : i32
    return %c0_i32, %c0_i32_0 : i32, i32
  }
  func.func @transform_9(%arg0: i32) -> (i32, i32, i32) {
    %c0_i32 = arith.constant 0 : i32
    %c0_i32_0 = arith.constant 0 : i32
    %c0_i32_1 = arith.constant 0 : i32
    return %arg0, %c0_i32, %c0_i32_0 : i32, i32, i32
  }
}

</mosaic_0001>

<llo_original>
// kernel: se_basic_block_forward.1
$region0: #{se_basic_block_forward.1}
  #allocation0 [shape = 'u32[]', space=smem, size = 0x4, offset = 0x4, fixed_abs, tag = 'smem constant byte address 0x4 - core index']
  #allocation1 [shape = 'u32[144,128]{1,0:T(1,128)}', space=vmem, size = 0x12000, scoped, tag = 'internal scratch']
  #allocation2 [shape = 'bf16[288,256]{1,0:T(8,128)(2,1)}', space=vmem, size = 0x24000, scoped, tag = 'scratch operand']
  %s0 = inlined_call_operand.vmem [shape: f32[2,32,256], index: 0, kind: input, shape index: {}]
  %s1 = inlined_call_operand.vmem [shape: bf16[32,288], index: 1, kind: input, shape index: {}]
  %s2 = inlined_call_operand.vmem [shape: bf16[32,288], index: 2, kind: input, shape index: {}]
  %s3 = inlined_call_operand.vmem [shape: f32[32,1], index: 3, kind: input, shape index: {}]
  %s4 = inlined_call_operand.vmem [shape: f32[32,1], index: 4, kind: input, shape index: {}]
  %s5 = inlined_call_operand.vmem [shape: f32[32,1], index: 5, kind: input, shape index: {}]
  %s6 = inlined_call_operand.vmem [shape: f32[32,1], index: 6, kind: input, shape index: {}]
  %s7 = inlined_call_operand.vmem [shape: f32[32,2], index: 7, kind: input, shape index: {}]
  %s8 = inlined_call_operand.vmem [shape: f32[32,2], index: 8, kind: input, shape index: {}]
  %s9 = inlined_call_operand.vmem [shape: f32[2,32,256], index: 9, kind: output, shape index: {}]
  %s10 = sld [smem:[#allocation0]]
  $region69: #{se_basic_block_forward.1} parent=0
    _
  %s12 = ssub.s32 1, %s10
  %s13 = scalar_select 0, %s12, %s10
  loop: start=0, step=1, limit=4
  $region2: #{se_basic_block_forward.1} parent=0 // loop_pre_header
    _
  $region3: #{se_basic_block_forward.1} parent=0 // loop_header
    %s15 = sphi 0, %s19
    %p16 = scmp.ge.s32.totalorder %s15, 4
    %s25 = sphi 0, %s27
    %s28 = sphi 0, %s25
    %s29 = sphi 0, %s28
    %s45 = sphi 0, %s29
    %s49 = sphi 0, %s49
    %s51 = sphi 0, %s49
    %s52 = sphi 0, %s51
    %s66 = sphi 0, %s52
    %s70 = sphi 0, %s70
    %s72 = sphi 0, %s70
    %s73 = sphi 0, %s72
    %s87 = sphi 0, %s73
    %s91 = sphi 0, %s91
    %s93 = sphi 0, %s91
    %s94 = sphi 0, %s93
    %s108 = sphi 0, %s94
    %s112 = sphi 0, %s112
    %s114 = sphi 0, %s112
    %s115 = sphi 0, %s114
    %s129 = sphi 0, %s115
    %s133 = sphi 0, %s133
    %s135 = sphi 0, %s133
    %s136 = sphi 0, %s135
    %s150 = sphi 0, %s136
    %s154 = sphi 0, %s154
    %s156 = sphi 0, %s154
    %s157 = sphi 0, %s156
    %s171 = sphi 0, %s157
    %s175 = sphi 0, %s175
    %s177 = sphi 0, %s175
    %s178 = sphi 0, %s177
    %s192 = sphi 0, %s178
    %s196 = sphi 0, %s196
    %s198 = sphi 0, %s196
    %s199 = sphi 0, %s198
    %s213 = sphi 0, %s199
    %s219 = sphi 0, %s221
    %s222 = sphi 0, %s219
    %s223 = sphi 0, %s222
    %s239 = sphi 0, %s223
  $region4: #{se_basic_block_forward.1} parent=0 // loop_header_branch
    %18 = sbr.rel (%p16) target = $region8
  $region5: #{se_basic_block_forward.1} parent=0 // loop_body
    %s20 = ssub.s32 %s15, 1
    %s21 = ssub.s32 %s15, 2
    %s22 = sadd.s32 %s15, 1
    %s23 = ssub.s32 %s15, %s22
    %p24 = scmp.eq.s32.totalorder %s23, 0
    %s26 = sadd.s32 %s25, 1
    %s27 = scalar_select %p24, %s25, %s26
    %p30 = pneg %p24
    %p31 = scmp.eq.s32.totalorder %s15, 1
    %p32 = por %p30, %p31
    %p33 = scmp.ne.s32.totalorder %s25, %s28
    %p34 = scmp.eq.s32.totalorder %s15, 0
    %p35 = por %p33, %p34
    %p36 = scmp.ne.s32.totalorder %s25, %s28
    %p37 = scmp.eq.s32.totalorder %s20, 1
    %p38 = por %p36, %p37
    %p39 = scmp.ne.s32.totalorder %s28, %s29
    %p40 = scmp.eq.s32.totalorder %s20, 0
    %p41 = por %p39, %p40
    %p42 = scmp.ne.s32.totalorder %s28, %s29
    %p43 = scmp.eq.s32.totalorder %s21, 1
    %p44 = por %p42, %p43
    %p46 = scmp.ne.s32.totalorder %s29, %s45
    %p47 = scmp.eq.s32.totalorder %s21, 0
    %p48 = por %p46, %p47
    %s50 = sadd.s32 %s49, 1
    %p53 = scmp.eq.s32.totalorder %s15, 1
    %p54 = scmp.ne.s32.totalorder %s49, %s51
    %p55 = scmp.eq.s32.totalorder %s15, 0
    %p56 = por %p54, %p55
    %p57 = scmp.ne.s32.totalorder %s49, %s51
    %p58 = scmp.eq.s32.totalorder %s20, 1
    %p59 = por %p57, %p58
    %p60 = scmp.ne.s32.totalorder %s51, %s52
    %p61 = scmp.eq.s32.totalorder %s20, 0
    %p62 = por %p60, %p61
    %p63 = scmp.ne.s32.totalorder %s51, %s52
    %p64 = scmp.eq.s32.totalorder %s21, 1
    %p65 = por %p63, %p64
    %p67 = scmp.ne.s32.totalorder %s52, %s66
    %p68 = scmp.eq.s32.totalorder %s21, 0
    %p69 = por %p67, %p68
    %s71 = sadd.s32 %s70, 1
    %p74 = scmp.eq.s32.totalorder %s15, 1
    %p75 = scmp.ne.s32.totalorder %s70, %s72
    %p76 = scmp.eq.s32.totalorder %s15, 0
    %p77 = por %p75, %p76
    %p78 = scmp.ne.s32.totalorder %s70, %s72
    %p79 = scmp.eq.s32.totalorder %s20, 1
    %p80 = por %p78, %p79
    %p81 = scmp.ne.s32.totalorder %s72, %s73
    %p82 = scmp.eq.s32.totalorder %s20, 0
    %p83 = por %p81, %p82
    %p84 = scmp.ne.s32.totalorder %s72, %s73
    %p85 = scmp.eq.s32.totalorder %s21, 1
    %p86 = por %p84, %p85
    %p88 = scmp.ne.s32.totalorder %s73, %s87
    %p89 = scmp.eq.s32.totalorder %s21, 0
    %p90 = por %p88, %p89
    %s92 = sadd.s32 %s91, 1
    %p95 = scmp.eq.s32.totalorder %s15, 1
    %p96 = scmp.ne.s32.totalorder %s91, %s93
    %p97 = scmp.eq.s32.totalorder %s15, 0
    %p98 = por %p96, %p97
    %p99 = scmp.ne.s32.totalorder %s91, %s93
    %p100 = scmp.eq.s32.totalorder %s20, 1
    %p101 = por %p99, %p100
    %p102 = scmp.ne.s32.totalorder %s93, %s94
    %p103 = scmp.eq.s32.totalorder %s20, 0
    %p104 = por %p102, %p103
    %p105 = scmp.ne.s32.totalorder %s93, %s94
    %p106 = scmp.eq.s32.totalorder %s21, 1
    %p107 = por %p105, %p106
    %p109 = scmp.ne.s32.totalorder %s94, %s108
    %p110 = scmp.eq.s32.totalorder %s21, 0
    %p111 = por %p109, %p110
    %s113 = sadd.s32 %s112, 1
    %p116 = scmp.eq.s32.totalorder %s15, 1
    %p117 = scmp.ne.s32.totalorder %s112, %s114
    %p118 = scmp.eq.s32.totalorder %s15, 0
    %p119 = por %p117, %p118
    %p120 = scmp.ne.s32.totalorder %s112, %s114
    %p121 = scmp.eq.s32.totalorder %s20, 1
    %p122 = por %p120, %p121
    %p123 = scmp.ne.s32.totalorder %s114, %s115
    %p124 = scmp.eq.s32.totalorder %s20, 0
    %p125 = por %p123, %p124
    %p126 = scmp.ne.s32.totalorder %s114, %s115
    %p127 = scmp.eq.s32.totalorder %s21, 1
    %p128 = por %p126, %p127
    %p130 = scmp.ne.s32.totalorder %s115, %s129
    %p131 = scmp.eq.s32.totalorder %s21, 0
    %p132 = por %p130, %p131
    %s134 = sadd.s32 %s133, 1
    %p137 = scmp.eq.s32.totalorder %s15, 1
    %p138 = scmp.ne.s32.totalorder %s133, %s135
    %p139 = scmp.eq.s32.totalorder %s15, 0
    %p140 = por %p138, %p139
    %p141 = scmp.ne.s32.totalorder %s133, %s135
    %p142 = scmp.eq.s32.totalorder %s20, 1
    %p143 = por %p141, %p142
    %p144 = scmp.ne.s32.totalorder %s135, %s136
    %p145 = scmp.eq.s32.totalorder %s20, 0
    %p146 = por %p144, %p145
    %p147 = scmp.ne.s32.totalorder %s135, %s136
    %p148 = scmp.eq.s32.totalorder %s21, 1
    %p149 = por %p147, %p148
    %p151 = scmp.ne.s32.totalorder %s136, %s150
    %p152 = scmp.eq.s32.totalorder %s21, 0
    %p153 = por %p151, %p152
    %s155 = sadd.s32 %s154, 1
    %p158 = scmp.eq.s32.totalorder %s15, 1
    %p159 = scmp.ne.s32.totalorder %s154, %s156
    %p160 = scmp.eq.s32.totalorder %s15, 0
    %p161 = por %p159, %p160
    %p162 = scmp.ne.s32.totalorder %s154, %s156
    %p163 = scmp.eq.s32.totalorder %s20, 1
    %p164 = por %p162, %p163
    %p165 = scmp.ne.s32.totalorder %s156, %s157
    %p166 = scmp.eq.s32.totalorder %s20, 0
    %p167 = por %p165, %p166
    %p168 = scmp.ne.s32.totalorder %s156, %s157
    %p169 = scmp.eq.s32.totalorder %s21, 1
    %p170 = por %p168, %p169
    %p172 = scmp.ne.s32.totalorder %s157, %s171
    %p173 = scmp.eq.s32.totalorder %s21, 0
    %p174 = por %p172, %p173
    %s176 = sadd.s32 %s175, 1
    %p179 = scmp.eq.s32.totalorder %s15, 1
    %p180 = scmp.ne.s32.totalorder %s175, %s177
    %p181 = scmp.eq.s32.totalorder %s15, 0
    %p182 = por %p180, %p181
    %p183 = scmp.ne.s32.totalorder %s175, %s177
    %p184 = scmp.eq.s32.totalorder %s20, 1
    %p185 = por %p183, %p184
    %p186 = scmp.ne.s32.totalorder %s177, %s178
    %p187 = scmp.eq.s32.totalorder %s20, 0
    %p188 = por %p186, %p187
    %p189 = scmp.ne.s32.totalorder %s177, %s178
    %p190 = scmp.eq.s32.totalorder %s21, 1
    %p191 = por %p189, %p190
    %p193 = scmp.ne.s32.totalorder %s178, %s192
    %p194 = scmp.eq.s32.totalorder %s21, 0
    %p195 = por %p193, %p194
    %s197 = sadd.s32 %s196, 1
    %p200 = scmp.eq.s32.totalorder %s15, 1
    %p201 = scmp.ne.s32.totalorder %s196, %s198
    %p202 = scmp.eq.s32.totalorder %s15, 0
    %p203 = por %p201, %p202
    %p204 = scmp.ne.s32.totalorder %s196, %s198
    %p205 = scmp.eq.s32.totalorder %s20, 1
    %p206 = por %p204, %p205
    %p207 = scmp.ne.s32.totalorder %s198, %s199
    %p208 = scmp.eq.s32.totalorder %s20, 0
    %p209 = por %p207, %p208
    %p210 = scmp.ne.s32.totalorder %s198, %s199
    %p211 = scmp.eq.s32.totalorder %s21, 1
    %p212 = por %p210, %p211
    %p214 = scmp.ne.s32.totalorder %s199, %s213
    %p215 = scmp.eq.s32.totalorder %s21, 0
    %p216 = por %p214, %p215
    %s217 = ssub.s32 %s15, %s22
    %p218 = scmp.eq.s32.totalorder %s217, 0
    %s220 = sadd.s32 %s219, 1
    %s221 = scalar_select %p218, %s219, %s220
    %p224 = pneg %p218
    %p225 = scmp.eq.s32.totalorder %s15, 1
    %p226 = por %p224, %p225
    %p227 = scmp.ne.s32.totalorder %s219, %s222
    %p228 = scmp.eq.s32.totalorder %s15, 0
    %p229 = por %p227, %p228
    %p230 = scmp.ne.s32.totalorder %s219, %s222
    %p231 = scmp.eq.s32.totalorder %s20, 1
    %p232 = por %p230, %p231
    %p233 = scmp.ne.s32.totalorder %s222, %s223
    %p234 = scmp.eq.s32.totalorder %s20, 0
    %p235 = por %p233, %p234
    %p236 = scmp.ne.s32.totalorder %s222, %s223
    %p237 = scmp.eq.s32.totalorder %s21, 1
    %p238 = por %p236, %p237
    %p240 = scmp.ne.s32.totalorder %s223, %s239
    %p241 = scmp.eq.s32.totalorder %s21, 0
    %p242 = por %p240, %p241
    %p243 = scmp.le.s32.totalorder 1, %s15
    %p244 = scmp.lt.s32.totalorder %s15, 3
    %p245 = pnand %p243, %p244
    %p246 = pneg %p245
    // Predicated region
    $region9: #{se_basic_block_forward.1} parent=5 // pred_check
      _
    $region10: #{se_basic_block_forward.1} parent=5 // pred_check_branch
      %248 = sbr.rel (%p245) target = $region12
    $region11: #{se_basic_block_forward.1} parent=5 // pred_region
      %s249 = ssub.s32 %s15, 1
      // Predicated region
      $region13: #{se_basic_block_forward.1} parent=11 // pred_check
        %p250 = pneg %p62
      $region14: #{se_basic_block_forward.1} parent=11 // pred_check_branch
        %252 = sbr.rel (%p250) target = $region16
      $region15: #{se_basic_block_forward.1} parent=11 // pred_region
        _
      $region16: #{se_basic_block_forward.1} parent=11 // pred_fallthru
        _
      // Predicated region
      $region17: #{se_basic_block_forward.1} parent=11 // pred_check
        %p253 = pneg %p83
      $region18: #{se_basic_block_forward.1} parent=11 // pred_check_branch
        %255 = sbr.rel (%p253) target = $region20
      $region19: #{se_basic_block_forward.1} parent=11 // pred_region
        _
      $region20: #{se_basic_block_forward.1} parent=11 // pred_fallthru
        _
      // Predicated region
      $region21: #{se_basic_block_forward.1} parent=11 // pred_check
        %p256 = pneg %p104
      $region22: #{se_basic_block_forward.1} parent=11 // pred_check_branch
        %258 = sbr.rel (%p256) target = $region24
      $region23: #{se_basic_block_forward.1} parent=11 // pred_region
        _
      $region24: #{se_basic_block_forward.1} parent=11 // pred_fallthru
        _
      // Predicated region
      $region25: #{se_basic_block_forward.1} parent=11 // pred_check
        %p259 = pneg %p125
      $region26: #{se_basic_block_forward.1} parent=11 // pred_check_branch
        %261 = sbr.rel (%p259) target = $region28
      $region27: #{se_basic_block_forward.1} parent=11 // pred_region
        _
      $region28: #{se_basic_block_forward.1} parent=11 // pred_fallthru
        _
      // Predicated region
      $region29: #{se_basic_block_forward.1} parent=11 // pred_check
        %p262 = pneg %p146
      $region30: #{se_basic_block_forward.1} parent=11 // pred_check_branch
        %264 = sbr.rel (%p262) target = $region32
      $region31: #{se_basic_block_forward.1} parent=11 // pred_region
        _
      $region32: #{se_basic_block_forward.1} parent=11 // pred_fallthru
        _
      // Predicated region
      $region33: #{se_basic_block_forward.1} parent=11 // pred_check
        %p265 = pneg %p167
      $region34: #{se_basic_block_forward.1} parent=11 // pred_check_branch
        %267 = sbr.rel (%p265) target = $region36
      $region35: #{se_basic_block_forward.1} parent=11 // pred_region
        _
      $region36: #{se_basic_block_forward.1} parent=11 // pred_fallthru
        _
      // Predicated region
      $region37: #{se_basic_block_forward.1} parent=11 // pred_check
        %p268 = pneg %p188
      $region38: #{se_basic_block_forward.1} parent=11 // pred_check_branch
        %270 = sbr.rel (%p268) target = $region40
      $region39: #{se_basic_block_forward.1} parent=11 // pred_region
        _
      $region40: #{se_basic_block_forward.1} parent=11 // pred_fallthru
        _
      // Predicated region
      $region41: #{se_basic_block_forward.1} parent=11 // pred_check
        %p271 = pneg %p209
      $region42: #{se_basic_block_forward.1} parent=11 // pred_check_branch
        %273 = sbr.rel (%p271) target = $region44
      $region43: #{se_basic_block_forward.1} parent=11 // pred_region
        _
      $region44: #{se_basic_block_forward.1} parent=11 // pred_fallthru
        _
    $region12: #{se_basic_block_forward.1} parent=5 // pred_fallthru
      _
    %p274 = scmp.lt.s32.totalorder %s15, 2
    // Predicated region
    $region45: #{se_basic_block_forward.1} parent=5 // pred_check
      %p275 = pneg %p274
    $region46: #{se_basic_block_forward.1} parent=5 // pred_check_branch
      %277 = sbr.rel (%p275) target = $region48
    $region47: #{se_basic_block_forward.1} parent=5 // pred_region
      // Predicated region
      $region49: #{se_basic_block_forward.1} parent=47 // pred_check
        %p278 = pneg %p35
      $region50: #{se_basic_block_forward.1} parent=47 // pred_check_branch
        %280 = sbr.rel (%p278) target = $region52
      $region51: #{se_basic_block_forward.1} parent=47 // pred_region
        %p281 = scmp.lt.s32.totalorder %s15, 1
        %s282 = scalar_select %p281, %s15, 1
        %s283 = smul.addr %s282, 8
        %s284 = smul.addr %s283, 8
        %s285 = scalar_lea.vmem %s0, %s284
      $region52: #{se_basic_block_forward.1} parent=47 // pred_fallthru
        _
    $region48: #{se_basic_block_forward.1} parent=5 // pred_fallthru
      _
    %p286 = scmp.le.s32.totalorder 1, %s15
    %p287 = scmp.lt.s32.totalorder %s15, 3
    %p288 = pnand %p286, %p287
    %p289 = pneg %p288
    // Predicated region
    $region53: #{se_basic_block_forward.1} parent=5 // pred_check
      _
    $region54: #{se_basic_block_forward.1} parent=5 // pred_check_branch
      %291 = sbr.rel (%p288) target = $region56
    $region55: #{se_basic_block_forward.1} parent=5 // pred_region
      %s292 = ssub.s32 %s15, 1
      %p293 = scmp.lt.s32.totalorder %s20, 1
      %s294 = scalar_select %p293, %s20, 1
      %s295 = smul.addr %s294, 8
      %s296 = smul.addr %s295, 8
      %s297 = scalar_lea.vmem %s0, %s296
      %p298 = pneg %p41
      %p299 = pneg %p38
      %p300 = pneg %p62
      %p301 = pneg %p59
      %p302 = pneg %p83
      %p303 = pneg %p80
      %p304 = pneg %p104
      %p305 = pneg %p101
      %p306 = pneg %p125
      %p307 = pneg %p122
      %p308 = pneg %p146
      %p309 = pneg %p143
      %p310 = pneg %p167
      %p311 = pneg %p164
      %p312 = pneg %p188
      %p313 = pneg %p185
      %p314 = pneg %p209
      %p315 = pneg %p206
      %p316 = pneg %p235
      %p317 = pneg %p232
      %p318 = scmp.lt.s32.totalorder %s20, 1
      %s319 = scalar_select %p318, %s20, 1
      %s320 = smul.addr %s319, 8
      %s321 = smul.addr %s320, 8
      %s322 = scalar_lea.vmem %s9, %s321
      %p323 = scmp.lt.s32.totalorder %s20, 1
      %s324 = scalar_select %p323, %s20, 1
      %s325 = smul.addr %s324, 8
      %s326 = smul.addr %s325, 8
      %s327 = scalar_lea.vmem %s0, %s326
      %p328 = scmp.lt.s32.totalorder %s20, 1
      %s329 = scalar_select %p328, %s20, 1
      %s330 = smul.addr %s329, 8
      %s331 = smul.addr %s330, 8
      %s332 = scalar_lea.vmem %s9, %s331
      %v336 = vlaneseq
      %v337 = vand.u32 %v336, 127
      %v338 = vadd.s32 %v337, 128
      %vm339 = vcmp.lt.s32.totalorder %v337, 0
      %v340 = vsub.s32 0, %v337
      %v341 = vsel %vm339, %v340, %v337
      %v342 = vshrl.u32 %v341, 4
      %v343 = vand.u32 %v341, 15
      %v344 = vsub.s32 0, %v343
      %v345 = vsel %vm339, %v344, %v343
      %vm346 = vcmp.lt.s32.totalorder %v338, 0
      %v347 = vsub.s32 0, %v338
      %v348 = vsel %vm346, %v347, %v338
      %v349 = vshrl.u32 %v348, 4
      %v350 = vand.u32 %v348, 15
      %v351 = vsub.s32 0, %v350
      %v352 = vsel %vm346, %v351, %v350
      %vm353 = vcmp.ne.s32.totalorder %v345, 0
      %vm354 = vcmp.ne.s32.totalorder %v352, 0
      %vm355 = vcmp.lt.s32.totalorder %v345, 0
      %vm356 = vcmp.lt.s32.totalorder %v352, 0
      %vm357 = vmand %vm355, %vm353
      %vm358 = vmand %vm356, %vm354
      %v359 = vadd.s32 %v345, 16
      %v360 = vadd.s32 %v352, 16
      %v361 = vsel %vm357, %v359, %v345
      %v362 = vsel %vm358, %v360, %v352
      %vm363 = vcmp.ge.s32.totalorder %v361, 1
      %vm364 = vcmp.ge.s32.totalorder %v362, 1
      %vm365 = vcmp.le.s32.totalorder %v361, 14
      %vm366 = vcmp.le.s32.totalorder %v362, 14
      %v367 = vld [vmem:[%s327] sm:$0xff]
      %v368 = vld [vmem:[%s327 + $0x8] sm:$0xff]
      %v369 = vld [vmem:[%s327 + $0x10] sm:$0xff]
      %v370 = vld [vmem:[%s327 + $0x18] sm:$0xff]
      %v371 = vld [vmem:[%s327 + $0x20] sm:$0xff]
      %v372 = vld [vmem:[%s327 + $0x28] sm:$0xff]
      %v373 = vld [vmem:[%s327 + $0x30] sm:$0xff]
      %v374 = vld [vmem:[%s327 + $0x38] sm:$0xff]
      %v375 = vpack.c.bf16 %v369, %v367
      %v376 = vpack.c.bf16 %v370, %v368
      %v377 = vpack.c.bf16 %v373, %v371
      %v378 = vpack.c.bf16 %v374, %v372
      %383 = vrot.lane.b32.xlu0 %v375, 17
      %v384 = vpop.permute.xlu0 %383
      %385 = vrot.lane.b32.xlu0 %v376, 17
      %v386 = vpop.permute.xlu0 %385
      %387 = vrot.lane.b32.xlu0 %v377, 17
      %v388 = vpop.permute.xlu0 %387
      %389 = vrot.lane.b32.xlu0 %v378, 17
      %v390 = vpop.permute.xlu0 %389
      %vm391 = vcmask 138240
      %v392 = vsel %vm391, %v384, %v386
      %v393 = vsel %vm391, %v388, %v390
      %vm396 = vcmask 138240
      %v399 = vsel %vm396, 0, %v384
      %v402 = vsel %vm396, 0, %v388
      %v405 = vsel %vm396, %v386, 0
      %v408 = vsel %vm396, %v390, 0
      %vm410 = vmpackc.low %vm364, %vm363
      %v411 = vsel %vm410, 65537, 0
      %v412 = vlaneseq
      %v413 = vshrl.u32 %v412, 7
      %v414 = vsub.s32 0, %v413
      %v415 = vrot.slane %v411, %v414
      %v416 = vlaneseq
      %v417 = vshrl.u32 %v416, 7
      %v418 = vsub.s32 4, %v417
      %v419 = vrot.slane %v411, %v418
      %vm420 = vcmp.ne.s16.totalorder %v415, 0
      %vm421 = vcmp.ne.s16.totalorder %v419, 0
      %v422 = vsel %vm420, %v399, 0
      %v423 = vsel %vm421, %v392, 0
      %v424 = vsel %vm420, %v402, 0
      %v425 = vsel %vm421, %v393, 0
      %v430 = vunpack.c.l.b16 %v422
      %v431 = vunpack.c.l.b16 %v423
      %v432 = vunpack.c.h.b16 %v422
      %v433 = vunpack.c.h.b16 %v423
      %v434 = vunpack.c.l.b16 %v424
      %v435 = vunpack.c.l.b16 %v425
      %v436 = vunpack.c.h.b16 %v424
      %v437 = vunpack.c.h.b16 %v425
      %v438 = vpack.c.b16 %v431, %v430
      %v439 = vpack.c.b16 %v433, %v432
      %v440 = vpack.c.b16 %v435, %v434
      %v441 = vpack.c.b16 %v437, %v436
      %446 = vst [vmem:[#allocation2] sm:$0xff] %v438
      %447 = vst [vmem:[#allocation2 + $0x8] sm:$0xff] %v439
      %448 = vst [vmem:[#allocation2 + $0x10] sm:$0xff] %v440
      %449 = vst [vmem:[#allocation2 + $0x18] sm:$0xff] %v441
      %v454 = vunpack.c.l.b16 %v399
      %v455 = vunpack.c.l.b16 %v392
      %v456 = vunpack.c.l.b16 %v405
      %v457 = vunpack.c.h.b16 %v399
      %v458 = vunpack.c.h.b16 %v392
      %v459 = vunpack.c.h.b16 %v405
      %v460 = vunpack.c.l.b16 %v402
      %v461 = vunpack.c.l.b16 %v393
      %v462 = vunpack.c.l.b16 %v408
      %v463 = vunpack.c.h.b16 %v402
      %v464 = vunpack.c.h.b16 %v393
      %v465 = vunpack.c.h.b16 %v408
      %v466 = vpack.c.b16 %v455, %v454
      %v467 = vpack.c.b16 %v456, %v456
      %v468 = vpack.c.b16 %v458, %v457
      %v469 = vpack.c.b16 %v459, %v459
      %v470 = vpack.c.b16 %v461, %v460
      %v471 = vpack.c.b16 %v462, %v462
      %v472 = vpack.c.b16 %v464, %v463
      %v473 = vpack.c.b16 %v465, %v465
      %474 = vrot.lane.b32.xlu0 %v466, 127
      %v475 = vpop.permute.xlu0 %474
      %476 = vrot.lane.b32.xlu0 %v467, 127
      %v477 = vpop.permute.xlu0 %476
      %478 = vrot.lane.b32.xlu0 %v468, 127
      %v479 = vpop.permute.xlu0 %478
      %480 = vrot.lane.b32.xlu0 %v469, 127
      %v481 = vpop.permute.xlu0 %480
      %482 = vrot.lane.b32.xlu0 %v470, 127
      %v483 = vpop.permute.xlu0 %482
      %484 = vrot.lane.b32.xlu0 %v471, 127
      %v485 = vpop.permute.xlu0 %484
      %486 = vrot.lane.b32.xlu0 %v472, 127
      %v487 = vpop.permute.xlu0 %486
      %488 = vrot.lane.b32.xlu0 %v473, 127
      %v489 = vpop.permute.xlu0 %488
      %v490 = vrot.slane %v475, 4
      %v491 = vrot.slane %v477, 4
      %v492 = vrot.slane %v479, 4
      %v493 = vrot.slane %v481, 4
      %v494 = vrot.slane %v483, 4
      %v495 = vrot.slane %v485, 4
      %v496 = vrot.slane %v487, 4
      %v497 = vrot.slane %v489, 4
      %vm498 = vcmask 1043456
      %v499 = vsel %vm498, %v490, %v491
      %vm500 = vcmask 1039360
      %v501 = vsel %vm500, %v475, %v499
      %v502 = vsel %vm498, %v492, %v493
      %v503 = vsel %vm500, %v479, %v502
      %v504 = vsel %vm498, %v494, %v495
      %v505 = vsel %vm500, %v483, %v504
      %v506 = vsel %vm498, %v496, %v497
      %v507 = vsel %vm500, %v487, %v506
      %512 = vst [vmem:[#allocation2 + $0x20] sm:$0xff] %v501
      %513 = vst [vmem:[#allocation2 + $0x28] sm:$0xff] %v503
      %514 = vst [vmem:[#allocation2 + $0x30] sm:$0xff] %v505
      %515 = vst [vmem:[#allocation2 + $0x38] sm:$0xff] %v507
      %vm516 = vmpackc.low %vm366, %vm365
      %v517 = vsel %vm516, 65537, 0
      %v518 = vlaneseq
      %v519 = vshrl.u32 %v518, 7
      %v520 = vsub.s32 0, %v519
      %v521 = vrot.slane %v517, %v520
      %v522 = vlaneseq
      %v523 = vshrl.u32 %v522, 7
      %v524 = vsub.s32 4, %v523
      %v525 = vrot.slane %v517, %v524
      %526 = vrot.lane.b32.xlu0 %v521, 2
      %v527 = vpop.permute.xlu0 %526
      %528 = vrot.lane.b32.xlu0 %v525, 2
      %v529 = vpop.permute.xlu0 %528
      %vm530 = vcmask 15360
      %v531 = vsel %vm530, %v527, %v529
      %vm532 = vcmp.ne.s16.totalorder %v527, 0
      %vm533 = vcmp.ne.s16.totalorder %v531, 0
      %vm534 = vcmp.ne.s16.totalorder %v529, 0
      %v535 = vsel %vm532, %v399, 0
      %v536 = vsel %vm533, %v392, 0
      %v537 = vsel %vm534, %v405, 0
      %v538 = vsel %vm532, %v402, 0
      %v539 = vsel %vm533, %v393, 0
      %v540 = vsel %vm534, %v408, 0
      %v547 = vunpack.c.l.b16 %v535
      %v548 = vunpack.c.l.b16 %v536
      %v549 = vunpack.c.l.b16 %v537
      %v550 = vunpack.c.h.b16 %v535
      %v551 = vunpack.c.h.b16 %v536
      %v552 = vunpack.c.h.b16 %v537
      %v553 = vunpack.c.l.b16 %v538
      %v554 = vunpack.c.l.b16 %v539
      %v555 = vunpack.c.l.b16 %v540
      %v556 = vunpack.c.h.b16 %v538
      %v557 = vunpack.c.h.b16 %v539
      %v558 = vunpack.c.h.b16 %v540
      %v559 = vpack.c.b16 %v548, %v547
      %v560 = vpack.c.b16 %v549, %v549
      %v561 = vpack.c.b16 %v551, %v550
      %v562 = vpack.c.b16 %v552, %v552
      %v563 = vpack.c.b16 %v554, %v553
      %v564 = vpack.c.b16 %v555, %v555
      %v565 = vpack.c.b16 %v557, %v556
      %v566 = vpack.c.b16 %v558, %v558
      %567 = vrot.lane.b32.xlu0 %v559, 126
      %v568 = vpop.permute.xlu0 %567
      %569 = vrot.lane.b32.xlu0 %v560, 126
      %v570 = vpop.permute.xlu0 %569
      %571 = vrot.lane.b32.xlu0 %v561, 126
      %v572 = vpop.permute.xlu0 %571
      %573 = vrot.lane.b32.xlu0 %v562, 126
      %v574 = vpop.permute.xlu0 %573
      %575 = vrot.lane.b32.xlu0 %v563, 126
      %v576 = vpop.permute.xlu0 %575
      %577 = vrot.lane.b32.xlu0 %v564, 126
      %v578 = vpop.permute.xlu0 %577
      %579 = vrot.lane.b32.xlu0 %v565, 126
      %v580 = vpop.permute.xlu0 %579
      %581 = vrot.lane.b32.xlu0 %v566, 126
      %v582 = vpop.permute.xlu0 %581
      %v583 = vrot.slane %v568, 4
      %v584 = vrot.slane %v570, 4
      %v585 = vrot.slane %v572, 4
      %v586 = vrot.slane %v574, 4
      %v587 = vrot.slane %v576, 4
      %v588 = vrot.slane %v578, 4
      %v589 = vrot.slane %v580, 4
      %v590 = vrot.slane %v582, 4
      %v591 = vsel %vm498, %v583, %v584
      %vm592 = vcmask 1031168
      %v593 = vsel %vm592, %v568, %v591
      %v594 = vsel %vm498, %v585, %v586
      %v595 = vsel %vm592, %v572, %v594
      %v596 = vsel %vm498, %v587, %v588
      %v597 = vsel %vm592, %v576, %v596
      %v598 = vsel %vm498, %v589, %v590
      %v599 = vsel %vm592, %v580, %v598
      %604 = vst [vmem:[#allocation2 + $0x40] sm:$0xff] %v593
      %605 = vst [vmem:[#allocation2 + $0x48] sm:$0xff] %v595
      %606 = vst [vmem:[#allocation2 + $0x50] sm:$0xff] %v597
      %607 = vst [vmem:[#allocation2 + $0x58] sm:$0xff] %v599
      %608 = vrot.lane.b32.xlu0 %v415, 16
      %v609 = vpop.permute.xlu0 %608
      %610 = vrot.lane.b32.xlu0 %v419, 16
      %v611 = vpop.permute.xlu0 %610
      %vm612 = vcmask 130048
      %v613 = vsel %vm612, %v609, %v611
      %vm614 = vcmp.ne.s16.totalorder %v609, 0
      %vm615 = vcmp.ne.s16.totalorder %v613, 0
      %vm616 = vcmp.ne.s16.totalorder %v611, 0
      %v617 = vsel %vm614, %v399, 0
      %v618 = vsel %vm615, %v392, 0
      %v619 = vsel %vm616, %v405, 0
      %v620 = vsel %vm614, %v402, 0
      %v621 = vsel %vm615, %v393, 0
      %v622 = vsel %vm616, %v408, 0
      %v629 = vunpack.c.l.b16 %v617
      %v630 = vunpack.c.l.b16 %v618
      %v631 = vunpack.c.l.b16 %v619
      %v632 = vunpack.c.h.b16 %v617
      %v633 = vunpack.c.h.b16 %v618
      %v634 = vunpack.c.h.b16 %v619
      %v635 = vunpack.c.l.b16 %v620
      %v636 = vunpack.c.l.b16 %v621
      %v637 = vunpack.c.l.b16 %v622
      %v638 = vunpack.c.h.b16 %v620
      %v639 = vunpack.c.h.b16 %v621
      %v640 = vunpack.c.h.b16 %v622
      %v641 = vpack.c.b16 %v630, %v629
      %v642 = vpack.c.b16 %v631, %v631
      %v643 = vpack.c.b16 %v633, %v632
      %v644 = vpack.c.b16 %v634, %v634
      %v645 = vpack.c.b16 %v636, %v635
      %v646 = vpack.c.b16 %v637, %v637
      %v647 = vpack.c.b16 %v639, %v638
      %v648 = vpack.c.b16 %v640, %v640
      %649 = vrot.lane.b32.xlu0 %v641, 112
      %v650 = vpop.permute.xlu0 %649
      %651 = vrot.lane.b32.xlu0 %v642, 112
      %v652 = vpop.permute.xlu0 %651
      %653 = vrot.lane.b32.xlu0 %v643, 112
      %v654 = vpop.permute.xlu0 %653
      %655 = vrot.lane.b32.xlu0 %v644, 112
      %v656 = vpop.permute.xlu0 %655
      %657 = vrot.lane.b32.xlu0 %v645, 112
      %v658 = vpop.permute.xlu0 %657
      %659 = vrot.lane.b32.xlu0 %v646, 112
      %v660 = vpop.permute.xlu0 %659
      %661 = vrot.lane.b32.xlu0 %v647, 112
      %v662 = vpop.permute.xlu0 %661
      %663 = vrot.lane.b32.xlu0 %v648, 112
      %v664 = vpop.permute.xlu0 %663
      %v665 = vrot.slane %v650, 4
      %v666 = vrot.slane %v652, 4
      %v667 = vrot.slane %v654, 4
      %v668 = vrot.slane %v656, 4
      %v669 = vrot.slane %v658, 4
      %v670 = vrot.slane %v660, 4
      %v671 = vrot.slane %v662, 4
      %v672 = vrot.slane %v664, 4
      %v673 = vsel %vm498, %v665, %v666
      %vm674 = vcmask 916480
      %v675 = vsel %vm674, %v650, %v673
      %v676 = vsel %vm498, %v667, %v668
      %v677 = vsel %vm674, %v654, %v676
      %v678 = vsel %vm498, %v669, %v670
      %v679 = vsel %vm674, %v658, %v678
      %v680 = vsel %vm498, %v671, %v672
      %v681 = vsel %vm674, %v662, %v680
      %686 = vst [vmem:[#allocation2 + $0x60] sm:$0xff] %v675
      %687 = vst [vmem:[#allocation2 + $0x68] sm:$0xff] %v677
      %688 = vst [vmem:[#allocation2 + $0x70] sm:$0xff] %v679
      %689 = vst [vmem:[#allocation2 + $0x78] sm:$0xff] %v681
      %690 = vrot.lane.b32.xlu0 %v466, 111
      %v691 = vpop.permute.xlu0 %690
      %692 = vrot.lane.b32.xlu0 %v467, 111
      %v693 = vpop.permute.xlu0 %692
      %694 = vrot.lane.b32.xlu0 %v468, 111
      %v695 = vpop.permute.xlu0 %694
      %696 = vrot.lane.b32.xlu0 %v469, 111
      %v697 = vpop.permute.xlu0 %696
      %698 = vrot.lane.b32.xlu0 %v470, 111
      %v699 = vpop.permute.xlu0 %698
      %700 = vrot.lane.b32.xlu0 %v471, 111
      %v701 = vpop.permute.xlu0 %700
      %702 = vrot.lane.b32.xlu0 %v472, 111
      %v703 = vpop.permute.xlu0 %702
      %704 = vrot.lane.b32.xlu0 %v473, 111
      %v705 = vpop.permute.xlu0 %704
      %v706 = vrot.slane %v691, 4
      %v707 = vrot.slane %v693, 4
      %v708 = vrot.slane %v695, 4
      %v709 = vrot.slane %v697, 4
      %v710 = vrot.slane %v699, 4
      %v711 = vrot.slane %v701, 4
      %v712 = vrot.slane %v703, 4
      %v713 = vrot.slane %v705, 4
      %v714 = vsel %vm498, %v706, %v707
      %vm715 = vcmask 908288
      %v716 = vsel %vm715, %v691, %v714
      %v717 = vsel %vm498, %v708, %v709
      %v718 = vsel %vm715, %v695, %v717
      %v719 = vsel %vm498, %v710, %v711
      %v720 = vsel %vm715, %v699, %v719
      %v721 = vsel %vm498, %v712, %v713
      %v722 = vsel %vm715, %v703, %v721
      %727 = vst [vmem:[#allocation2 + $0x80] sm:$0xff] %v716
      %728 = vst [vmem:[#allocation2 + $0x88] sm:$0xff] %v718
      %729 = vst [vmem:[#allocation2 + $0x90] sm:$0xff] %v720
      %730 = vst [vmem:[#allocation2 + $0x98] sm:$0xff] %v722
      %731 = vrot.lane.b32.xlu0 %v521, 18
      %v732 = vpop.permute.xlu0 %731
      %733 = vrot.lane.b32.xlu0 %v525, 18
      %v734 = vpop.permute.xlu0 %733
      %vm735 = vcmask 146432
      %v736 = vsel %vm735, %v732, %v734
      %vm737 = vcmp.ne.s16.totalorder %v732, 0
      %vm738 = vcmp.ne.s16.totalorder %v736, 0
      %vm739 = vcmp.ne.s16.totalorder %v734, 0
      %v740 = vsel %vm737, %v399, 0
      %v741 = vsel %vm738, %v392, 0
      %v742 = vsel %vm739, %v405, 0
      %v743 = vsel %vm737, %v402, 0
      %v744 = vsel %vm738, %v393, 0
      %v745 = vsel %vm739, %v408, 0
      %v752 = vunpack.c.l.b16 %v740
      %v753 = vunpack.c.l.b16 %v741
      %v754 = vunpack.c.l.b16 %v742
      %v755 = vunpack.c.h.b16 %v740
      %v756 = vunpack.c.h.b16 %v741
      %v757 = vunpack.c.h.b16 %v742
      %v758 = vunpack.c.l.b16 %v743
      %v759 = vunpack.c.l.b16 %v744
      %v760 = vunpack.c.l.b16 %v745
      %v761 = vunpack.c.h.b16 %v743
      %v762 = vunpack.c.h.b16 %v744
      %v763 = vunpack.c.h.b16 %v745
      %v764 = vpack.c.b16 %v753, %v752
      %v765 = vpack.c.b16 %v754, %v754
      %v766 = vpack.c.b16 %v756, %v755
      %v767 = vpack.c.b16 %v757, %v757
      %v768 = vpack.c.b16 %v759, %v758
      %v769 = vpack.c.b16 %v760, %v760
      %v770 = vpack.c.b16 %v762, %v761
      %v771 = vpack.c.b16 %v763, %v763
      %772 = vrot.lane.b32.xlu0 %v764, 110
      %v773 = vpop.permute.xlu0 %772
      %774 = vrot.lane.b32.xlu0 %v765, 110
      %v775 = vpop.permute.xlu0 %774
      %776 = vrot.lane.b32.xlu0 %v766, 110
      %v777 = vpop.permute.xlu0 %776
      %778 = vrot.lane.b32.xlu0 %v767, 110
      %v779 = vpop.permute.xlu0 %778
      %780 = vrot.lane.b32.xlu0 %v768, 110
      %v781 = vpop.permute.xlu0 %780
      %782 = vrot.lane.b32.xlu0 %v769, 110
      %v783 = vpop.permute.xlu0 %782
      %784 = vrot.lane.b32.xlu0 %v770, 110
      %v785 = vpop.permute.xlu0 %784
      %786 = vrot.lane.b32.xlu0 %v771, 110
      %v787 = vpop.permute.xlu0 %786
      %v788 = vrot.slane %v773, 4
      %v789 = vrot.slane %v775, 4
      %v790 = vrot.slane %v777, 4
      %v791 = vrot.slane %v779, 4
      %v792 = vrot.slane %v781, 4
      %v793 = vrot.slane %v783, 4
      %v794 = vrot.slane %v785, 4
      %v795 = vrot.slane %v787, 4
      %v796 = vsel %vm498, %v788, %v789
      %vm797 = vcmask 900096
      %v798 = vsel %vm797, %v773, %v796
      %v799 = vsel %vm498, %v790, %v791
      %v800 = vsel %vm797, %v777, %v799
      %v801 = vsel %vm498, %v792, %v793
      %v802 = vsel %vm797, %v781, %v801
      %v803 = vsel %vm498, %v794, %v795
      %v804 = vsel %vm797, %v785, %v803
      %809 = vst [vmem:[#allocation2 + $0xa0] sm:$0xff] %v798
      %810 = vst [vmem:[#allocation2 + $0xa8] sm:$0xff] %v800
      %811 = vst [vmem:[#allocation2 + $0xb0] sm:$0xff] %v802
      %812 = vst [vmem:[#allocation2 + $0xb8] sm:$0xff] %v804
      %813 = vrot.lane.b32.xlu0 %v415, 32
      %v814 = vpop.permute.xlu0 %813
      %815 = vrot.lane.b32.xlu0 %v419, 32
      %v816 = vpop.permute.xlu0 %815
      %vm817 = vcmask 261120
      %v818 = vsel %vm817, %v814, %v816
      %vm819 = vcmp.ne.s16.totalorder %v814, 0
      %vm820 = vcmp.ne.s16.totalorder %v818, 0
      %vm821 = vcmp.ne.s16.totalorder %v816, 0
      %v822 = vsel %vm819, %v399, 0
      %v823 = vsel %vm820, %v392, 0
      %v824 = vsel %vm821, %v405, 0
      %v825 = vsel %vm819, %v402, 0
      %v826 = vsel %vm820, %v393, 0
      %v827 = vsel %vm821, %v408, 0
      %v834 = vunpack.c.l.b16 %v822
      %v835 = vunpack.c.l.b16 %v823
      %v836 = vunpack.c.l.b16 %v824
      %v837 = vunpack.c.h.b16 %v822
      %v838 = vunpack.c.h.b16 %v823
      %v839 = vunpack.c.h.b16 %v824
      %v840 = vunpack.c.l.b16 %v825
      %v841 = vunpack.c.l.b16 %v826
      %v842 = vunpack.c.l.b16 %v827
      %v843 = vunpack.c.h.b16 %v825
      %v844 = vunpack.c.h.b16 %v826
      %v845 = vunpack.c.h.b16 %v827
      %v846 = vpack.c.b16 %v835, %v834
      %v847 = vpack.c.b16 %v836, %v836
      %v848 = vpack.c.b16 %v838, %v837
      %v849 = vpack.c.b16 %v839, %v839
      %v850 = vpack.c.b16 %v841, %v840
      %v851 = vpack.c.b16 %v842, %v842
      %v852 = vpack.c.b16 %v844, %v843
      %v853 = vpack.c.b16 %v845, %v845
      %854 = vrot.lane.b32.xlu0 %v846, 96
      %v855 = vpop.permute.xlu0 %854
      %856 = vrot.lane.b32.xlu0 %v847, 96
      %v857 = vpop.permute.xlu0 %856
      %858 = vrot.lane.b32.xlu0 %v848, 96
      %v859 = vpop.permute.xlu0 %858
      %860 = vrot.lane.b32.xlu0 %v849, 96
      %v861 = vpop.permute.xlu0 %860
      %862 = vrot.lane.b32.xlu0 %v850, 96
      %v863 = vpop.permute.xlu0 %862
      %864 = vrot.lane.b32.xlu0 %v851, 96
      %v865 = vpop.permute.xlu0 %864
      %866 = vrot.lane.b32.xlu0 %v852, 96
      %v867 = vpop.permute.xlu0 %866
      %868 = vrot.lane.b32.xlu0 %v853, 96
      %v869 = vpop.permute.xlu0 %868
      %v870 = vrot.slane %v855, 4
      %v871 = vrot.slane %v857, 4
      %v872 = vrot.slane %v859, 4
      %v873 = vrot.slane %v861, 4
      %v874 = vrot.slane %v863, 4
      %v875 = vrot.slane %v865, 4
      %v876 = vrot.slane %v867, 4
      %v877 = vrot.slane %v869, 4
      %v878 = vsel %vm498, %v870, %v871
      %vm879 = vcmask 785408
      %v880 = vsel %vm879, %v855, %v878
      %v881 = vsel %vm498, %v872, %v873
      %v882 = vsel %vm879, %v859, %v881
      %v883 = vsel %vm498, %v874, %v875
      %v884 = vsel %vm879, %v863, %v883
      %v885 = vsel %vm498, %v876, %v877
      %v886 = vsel %vm879, %v867, %v885
      %891 = vst [vmem:[#allocation2 + $0xc0] sm:$0xff] %v880
      %892 = vst [vmem:[#allocation2 + $0xc8] sm:$0xff] %v882
      %893 = vst [vmem:[#allocation2 + $0xd0] sm:$0xff] %v884
      %894 = vst [vmem:[#allocation2 + $0xd8] sm:$0xff] %v886
      %895 = vrot.lane.b32.xlu0 %v466, 95
      %v896 = vpop.permute.xlu0 %895
      %897 = vrot.lane.b32.xlu0 %v467, 95
      %v898 = vpop.permute.xlu0 %897
      %899 = vrot.lane.b32.xlu0 %v468, 95
      %v900 = vpop.permute.xlu0 %899
      %901 = vrot.lane.b32.xlu0 %v469, 95
      %v902 = vpop.permute.xlu0 %901
      %903 = vrot.lane.b32.xlu0 %v470, 95
      %v904 = vpop.permute.xlu0 %903
      %905 = vrot.lane.b32.xlu0 %v471, 95
      %v906 = vpop.permute.xlu0 %905
      %907 = vrot.lane.b32.xlu0 %v472, 95
      %v908 = vpop.permute.xlu0 %907
      %909 = vrot.lane.b32.xlu0 %v473, 95
      %v910 = vpop.permute.xlu0 %909
      %v911 = vrot.slane %v896, 4
      %v912 = vrot.slane %v898, 4
      %v913 = vrot.slane %v900, 4
      %v914 = vrot.slane %v902, 4
      %v915 = vrot.slane %v904, 4
      %v916 = vrot.slane %v906, 4
      %v917 = vrot.slane %v908, 4
      %v918 = vrot.slane %v910, 4
      %v919 = vsel %vm498, %v911, %v912
      %vm920 = vcmask 777216
      %v921 = vsel %vm920, %v896, %v919
      %v922 = vsel %vm498, %v913, %v914
      %v923 = vsel %vm920, %v900, %v922
      %v924 = vsel %vm498, %v915, %v916
      %v925 = vsel %vm920, %v904, %v924
      %v926 = vsel %vm498, %v917, %v918
      %v927 = vsel %vm920, %v908, %v926
      %932 = vst [vmem:[#allocation2 + $0xe0] sm:$0xff] %v921
      %933 = vst [vmem:[#allocation2 + $0xe8] sm:$0xff] %v923
      %934 = vst [vmem:[#allocation2 + $0xf0] sm:$0xff] %v925
      %935 = vst [vmem:[#allocation2 + $0xf8] sm:$0xff] %v927
      %936 = vrot.lane.b32.xlu0 %v521, 34
      %v937 = vpop.permute.xlu0 %936
      %938 = vrot.lane.b32.xlu0 %v525, 34
      %v939 = vpop.permute.xlu0 %938
      %vm940 = vcmask 277504
      %v941 = vsel %vm940, %v937, %v939
      %vm942 = vcmp.ne.s16.totalorder %v937, 0
      %vm943 = vcmp.ne.s16.totalorder %v941, 0
      %vm944 = vcmp.ne.s16.totalorder %v939, 0
      %v945 = vsel %vm942, %v399, 0
      %v946 = vsel %vm943, %v392, 0
      %v947 = vsel %vm944, %v405, 0
      %v948 = vsel %vm942, %v402, 0
      %v949 = vsel %vm943, %v393, 0
      %v950 = vsel %vm944, %v408, 0
      %v957 = vunpack.c.l.b16 %v945
      %v958 = vunpack.c.l.b16 %v946
      %v959 = vunpack.c.l.b16 %v947
      %v960 = vunpack.c.h.b16 %v945
      %v961 = vunpack.c.h.b16 %v946
      %v962 = vunpack.c.h.b16 %v947
      %v963 = vunpack.c.l.b16 %v948
      %v964 = vunpack.c.l.b16 %v949
      %v965 = vunpack.c.l.b16 %v950
      %v966 = vunpack.c.h.b16 %v948
      %v967 = vunpack.c.h.b16 %v949
      %v968 = vunpack.c.h.b16 %v950
      %v969 = vpack.c.b16 %v958, %v957
      %v970 = vpack.c.b16 %v959, %v959
      %v971 = vpack.c.b16 %v961, %v960
      %v972 = vpack.c.b16 %v962, %v962
      %v973 = vpack.c.b16 %v964, %v963
      %v974 = vpack.c.b16 %v965, %v965
      %v975 = vpack.c.b16 %v967, %v966
      %v976 = vpack.c.b16 %v968, %v968
      %977 = vrot.lane.b32.xlu0 %v969, 94
      %v978 = vpop.permute.xlu0 %977
      %979 = vrot.lane.b32.xlu0 %v970, 94
      %v980 = vpop.permute.xlu0 %979
      %981 = vrot.lane.b32.xlu0 %v971, 94
      %v982 = vpop.permute.xlu0 %981
      %983 = vrot.lane.b32.xlu0 %v972, 94
      %v984 = vpop.permute.xlu0 %983
      %985 = vrot.lane.b32.xlu0 %v973, 94
      %v986 = vpop.permute.xlu0 %985
      %987 = vrot.lane.b32.xlu0 %v974, 94
      %v988 = vpop.permute.xlu0 %987
      %989 = vrot.lane.b32.xlu0 %v975, 94
      %v990 = vpop.permute.xlu0 %989
      %991 = vrot.lane.b32.xlu0 %v976, 94
      %v992 = vpop.permute.xlu0 %991
      %v993 = vrot.slane %v978, 4
      %v994 = vrot.slane %v980, 4
      %v995 = vrot.slane %v982, 4
      %v996 = vrot.slane %v984, 4
      %v997 = vrot.slane %v986, 4
      %v998 = vrot.slane %v988, 4
      %v999 = vrot.slane %v990, 4
      %v1000 = vrot.slane %v992, 4
      %v1001 = vsel %vm498, %v993, %v994
      %vm1002 = vcmask 769024
      %v1003 = vsel %vm1002, %v978, %v1001
      %v1004 = vsel %vm498, %v995, %v996
      %v1005 = vsel %vm1002, %v982, %v1004
      %v1006 = vsel %vm498, %v997, %v998
      %v1007 = vsel %vm1002, %v986, %v1006
      %v1008 = vsel %vm498, %v999, %v1000
      %v1009 = vsel %vm1002, %v990, %v1008
      %1014 = vst [vmem:[#allocation2 + $0x100] sm:$0xff] %v1003
      %1015 = vst [vmem:[#allocation2 + $0x108] sm:$0xff] %v1005
      %1016 = vst [vmem:[#allocation2 + $0x110] sm:$0xff] %v1007
      %1017 = vst [vmem:[#allocation2 + $0x118] sm:$0xff] %v1009
      %v1018 = vld [vmem:[%s1] sm:$0xff]
      %v1019 = vld [vmem:[%s1 + $0x8] sm:$0xf]
      %v1020 = vld [vmem:[%s1 + $0xc] sm:$0xff]
      %v1021 = vld [vmem:[%s1 + $0x14] sm:$0xf]
      %v1022 = vld [vmem:[%s1 + $0x18] sm:$0xff]
      %v1023 = vld [vmem:[%s1 + $0x20] sm:$0xf]
      %v1024 = vld [vmem:[%s1 + $0x24] sm:$0xff]
      %v1025 = vld [vmem:[%s1 + $0x2c] sm:$0xf]
      %v1026 = vld [vmem:[#allocation2] sm:$0xff]
      %v1027 = vld [vmem:[#allocation2 + $0x8] sm:$0xff]
      %v1028 = vld [vmem:[#allocation2 + $0x10] sm:$0xff]
      %v1029 = vld [vmem:[#allocation2 + $0x18] sm:$0xff]
      %v1030 = vld [vmem:[#allocation2 + $0x20] sm:$0xff]
      %v1031 = vld [vmem:[#allocation2 + $0x28] sm:$0xff]
      %v1032 = vld [vmem:[#allocation2 + $0x30] sm:$0xff]
      %v1033 = vld [vmem:[#allocation2 + $0x38] sm:$0xff]
      %v1034 = vld [vmem:[#allocation2 + $0x40] sm:$0xff]
      %v1035 = vld [vmem:[#allocation2 + $0x48] sm:$0xff]
      %v1036 = vld [vmem:[#allocation2 + $0x50] sm:$0xff]
      %v1037 = vld [vmem:[#allocation2 + $0x58] sm:$0xff]
      %v1038 = vld [vmem:[#allocation2 + $0x60] sm:$0xff]
      %v1039 = vld [vmem:[#allocation2 + $0x68] sm:$0xff]
      %v1040 = vld [vmem:[#allocation2 + $0x70] sm:$0xff]
      %v1041 = vld [vmem:[#allocation2 + $0x78] sm:$0xff]
      %v1042 = vld [vmem:[#allocation2 + $0x80] sm:$0xff]
      %v1043 = vld [vmem:[#allocation2 + $0x88] sm:$0xff]
      %v1044 = vld [vmem:[#allocation2 + $0x90] sm:$0xff]
      %v1045 = vld [vmem:[#allocation2 + $0x98] sm:$0xff]
      %v1046 = vld [vmem:[#allocation2 + $0xa0] sm:$0xff]
      %v1047 = vld [vmem:[#allocation2 + $0xa8] sm:$0xff]
      %v1048 = vld [vmem:[#allocation2 + $0xb0] sm:$0xff]
      %v1049 = vld [vmem:[#allocation2 + $0xb8] sm:$0xff]
      %v1050 = vld [vmem:[#allocation2 + $0xc0] sm:$0xff]
      %v1051 = vld [vmem:[#allocation2 + $0xc8] sm:$0xff]
      %v1052 = vld [vmem:[#allocation2 + $0xd0] sm:$0xff]
      %v1053 = vld [vmem:[#allocation2 + $0xd8] sm:$0xff]
      %v1054 = vld [vmem:[#allocation2 + $0xe0] sm:$0xff]
      %v1055 = vld [vmem:[#allocation2 + $0xe8] sm:$0xff]
      %v1056 = vld [vmem:[#allocation2 + $0xf0] sm:$0xff]
      %v1057 = vld [vmem:[#allocation2 + $0xf8] sm:$0xff]
      %v1058 = vld [vmem:[#allocation2 + $0x100] sm:$0xff]
      %v1059 = vld [vmem:[#allocation2 + $0x108] sm:$0xff]
      %v1060 = vld [vmem:[#allocation2 + $0x110] sm:$0xff]
      %v1061 = vld [vmem:[#allocation2 + $0x118] sm:$0xff]
      %v1070 = vunpack.c.l.b16 %v1018
      %v1071 = vunpack.c.h.b16 %v1018
      %v1072 = vunpack.c.l.b16 %v1019
      %v1073 = vunpack.c.l.b16 %v1020
      %v1074 = vunpack.c.h.b16 %v1020
      %v1075 = vunpack.c.l.b16 %v1021
      %v1076 = vunpack.c.l.b16 %v1022
      %v1077 = vunpack.c.h.b16 %v1022
      %v1078 = vunpack.c.l.b16 %v1023
      %v1079 = vunpack.c.l.b16 %v1024
      %v1080 = vunpack.c.h.b16 %v1024
      %v1081 = vunpack.c.l.b16 %v1025
      %v1082 = vpack.c.b16 %v1073, %v1070
      %v1083 = vpack.c.b16 %v1074, %v1071
      %v1084 = vpack.c.b16 %v1075, %v1072
      %v1085 = vpack.c.b16 %v1079, %v1076
      %v1086 = vpack.c.b16 %v1080, %v1077
      %v1087 = vpack.c.b16 %v1081, %v1078
      %v1128 = vunpack.c.l.b16 %v1026
      %v1129 = vunpack.c.h.b16 %v1026
      %v1130 = vunpack.c.l.b16 %v1027
      %v1131 = vunpack.c.h.b16 %v1027
      %v1132 = vunpack.c.l.b16 %v1028
      %v1133 = vunpack.c.h.b16 %v1028
      %v1134 = vunpack.c.l.b16 %v1029
      %v1135 = vunpack.c.h.b16 %v1029
      %v1136 = vunpack.c.l.b16 %v1030
      %v1137 = vunpack.c.h.b16 %v1030
      %v1138 = vunpack.c.l.b16 %v1031
      %v1139 = vunpack.c.h.b16 %v1031
      %v1140 = vunpack.c.l.b16 %v1032
      %v1141 = vunpack.c.h.b16 %v1032
      %v1142 = vunpack.c.l.b16 %v1033
      %v1143 = vunpack.c.h.b16 %v1033
      %v1144 = vunpack.c.l.b16 %v1034
      %v1145 = vunpack.c.h.b16 %v1034
      %v1146 = vunpack.c.l.b16 %v1035
      %v1147 = vunpack.c.h.b16 %v1035
      %v1148 = vunpack.c.l.b16 %v1036
      %v1149 = vunpack.c.h.b16 %v1036
      %v1150 = vunpack.c.l.b16 %v1037
      %v1151 = vunpack.c.h.b16 %v1037
      %v1152 = vunpack.c.l.b16 %v1038
      %v1153 = vunpack.c.h.b16 %v1038
      %v1154 = vunpack.c.l.b16 %v1039
      %v1155 = vunpack.c.h.b16 %v1039
      %v1156 = vunpack.c.l.b16 %v1040
      %v1157 = vunpack.c.h.b16 %v1040
      %v1158 = vunpack.c.l.b16 %v1041
      %v1159 = vunpack.c.h.b16 %v1041
      %v1160 = vunpack.c.l.b16 %v1042
      %v1161 = vunpack.c.h.b16 %v1042
      %v1162 = vunpack.c.l.b16 %v1043
      %v1163 = vunpack.c.h.b16 %v1043
      %v1164 = vunpack.c.l.b16 %v1044
      %v1165 = vunpack.c.h.b16 %v1044
      %v1166 = vunpack.c.l.b16 %v1045
      %v1167 = vunpack.c.h.b16 %v1045
      %v1168 = vunpack.c.l.b16 %v1046
      %v1169 = vunpack.c.h.b16 %v1046
      %v1170 = vunpack.c.l.b16 %v1047
      %v1171 = vunpack.c.h.b16 %v1047
      %v1172 = vunpack.c.l.b16 %v1048
      %v1173 = vunpack.c.h.b16 %v1048
      %v1174 = vunpack.c.l.b16 %v1049
      %v1175 = vunpack.c.h.b16 %v1049
      %v1176 = vunpack.c.l.b16 %v1050
      %v1177 = vunpack.c.h.b16 %v1050
      %v1178 = vunpack.c.l.b16 %v1051
      %v1179 = vunpack.c.h.b16 %v1051
      %v1180 = vunpack.c.l.b16 %v1052
      %v1181 = vunpack.c.h.b16 %v1052
      %v1182 = vunpack.c.l.b16 %v1053
      %v1183 = vunpack.c.h.b16 %v1053
      %v1184 = vunpack.c.l.b16 %v1054
      %v1185 = vunpack.c.h.b16 %v1054
      %v1186 = vunpack.c.l.b16 %v1055
      %v1187 = vunpack.c.h.b16 %v1055
      %v1188 = vunpack.c.l.b16 %v1056
      %v1189 = vunpack.c.h.b16 %v1056
      %v1190 = vunpack.c.l.b16 %v1057
      %v1191 = vunpack.c.h.b16 %v1057
      %v1192 = vunpack.c.l.b16 %v1058
      %v1193 = vunpack.c.h.b16 %v1058
      %v1194 = vunpack.c.l.b16 %v1059
      %v1195 = vunpack.c.h.b16 %v1059
      %v1196 = vunpack.c.l.b16 %v1060
      %v1197 = vunpack.c.h.b16 %v1060
      %v1198 = vunpack.c.l.b16 %v1061
      %v1199 = vunpack.c.h.b16 %v1061
      %v1200 = vpack.c.b16 %v1130, %v1128
      %v1201 = vpack.c.b16 %v1131, %v1129
      %v1202 = vpack.c.b16 %v1134, %v1132
      %v1203 = vpack.c.b16 %v1135, %v1133
      %v1204 = vpack.c.b16 %v1138, %v1136
      %v1205 = vpack.c.b16 %v1139, %v1137
      %v1206 = vpack.c.b16 %v1142, %v1140
      %v1207 = vpack.c.b16 %v1143, %v1141
      %v1208 = vpack.c.b16 %v1146, %v1144
      %v1209 = vpack.c.b16 %v1147, %v1145
      %v1210 = vpack.c.b16 %v1150, %v1148
      %v1211 = vpack.c.b16 %v1151, %v1149
      %v1212 = vpack.c.b16 %v1154, %v1152
      %v1213 = vpack.c.b16 %v1155, %v1153
      %v1214 = vpack.c.b16 %v1158, %v1156
      %v1215 = vpack.c.b16 %v1159, %v1157
      %v1216 = vpack.c.b16 %v1162, %v1160
      %v1217 = vpack.c.b16 %v1163, %v1161
      %v1218 = vpack.c.b16 %v1166, %v1164
      %v1219 = vpack.c.b16 %v1167, %v1165
      %v1220 = vpack.c.b16 %v1170, %v1168
      %v1221 = vpack.c.b16 %v1171, %v1169
      %v1222 = vpack.c.b16 %v1174, %v1172
      %v1223 = vpack.c.b16 %v1175, %v1173
      %v1224 = vpack.c.b16 %v1178, %v1176
      %v1225 = vpack.c.b16 %v1179, %v1177
      %v1226 = vpack.c.b16 %v1182, %v1180
      %v1227 = vpack.c.b16 %v1183, %v1181
      %v1228 = vpack.c.b16 %v1186, %v1184
      %v1229 = vpack.c.b16 %v1187, %v1185
      %v1230 = vpack.c.b16 %v1190, %v1188
      %v1231 = vpack.c.b16 %v1191, %v1189
      %v1232 = vpack.c.b16 %v1194, %v1192
      %v1233 = vpack.c.b16 %v1195, %v1193
      %v1234 = vpack.c.b16 %v1198, %v1196
      %v1235 = vpack.c.b16 %v1199, %v1197
      %vm1272 = vcmask 261120
      %v1274 = vsel %vm1272, %v1084, 0
      %v1277 = vsel %vm1272, %v1087, 0
      %1279 = vmatprep.subr.bf16.mxu0 %v1215
      %1280 = vmatpush1.bf16.msra.mxu0 %v1214
      %1281 = vmatprep.subr.bf16.mxu0 %v1213
      %1282 = vmatpush1.bf16.msra.mxu0 %v1212
      %1283 = vmatprep.subr.bf16.mxu0 %v1211
      %1284 = vmatpush1.bf16.msra.mxu0 %v1210
      %1285 = vmatprep.subr.bf16.mxu0 %v1209
      %1286 = vmatpush1.bf16.msra.mxu0 %v1208
      %1287 = vmatprep.subr.bf16.mxu0 %v1207
      %1288 = vmatpush1.bf16.msra.mxu0 %v1206
      %1289 = vmatprep.subr.bf16.mxu0 %v1205
      %1290 = vmatpush1.bf16.msra.mxu0 %v1204
      %1291 = vmatprep.subr.bf16.mxu0 %v1203
      %1292 = vmatpush1.bf16.msra.mxu0 %v1202
      %1293 = vmatprep.subr.bf16.mxu0 %v1201
      %1294 = vmatpush1.bf16.msra.mxu0 %v1200
      %1295 = vmatprep.subr.bf16.mxu0 %v1231
      %1296 = vmatpush2.bf16.msra.mxu0 %v1230
      %1297 = vmatprep.subr.bf16.mxu0 %v1229
      %1298 = vmatpush2.bf16.msra.mxu0 %v1228
      %1299 = vmatprep.subr.bf16.mxu0 %v1227
      %1300 = vmatpush2.bf16.msra.mxu0 %v1226
      %1301 = vmatprep.subr.bf16.mxu0 %v1225
      %1302 = vmatpush2.bf16.msra.mxu0 %v1224
      %1303 = vmatprep.subr.bf16.mxu0 %v1223
      %1304 = vmatpush2.bf16.msra.mxu0 %v1222
      %1305 = vmatprep.subr.bf16.mxu0 %v1221
      %1306 = vmatpush2.bf16.msra.mxu0 %v1220
      %1307 = vmatprep.subr.bf16.mxu0 %v1219
      %1308 = vmatpush2.bf16.msra.mxu0 %v1218
      %1309 = vmatprep.subr.bf16.mxu0 %v1217
      %1310 = vmatpush2.bf16.msra.mxu0 %v1216
      %1311 = vmatprep.mubr.bf16.mxu0 %v1083
      %1312 = vmatmul.mubr.bf16.gmra.mxu0 %v1082
      %v1313 = vpop.f32.mrf.mxu0
      %v1314 = vadd.f32 0.0, %v1313
      %v1315 = vpop.f32.mrf.mxu0
      %v1316 = vadd.f32 0.0, %v1315
      %v1317 = vpop.f32.mrf.mxu0
      %v1318 = vadd.f32 0.0, %v1317
      %v1319 = vpop.f32.mrf.mxu0
      %v1320 = vadd.f32 0.0, %v1319
      %1321 = vmatprep.mubr.bf16.mxu0 %v1086
      %1322 = vmatmul.mubr.bf16.gmra.mxu0 %v1085
      %v1323 = vpop.f32.mrf.mxu0
      %v1324 = vadd.f32 0.0, %v1323
      %v1325 = vpop.f32.mrf.mxu0
      %v1326 = vadd.f32 0.0, %v1325
      %v1327 = vpop.f32.mrf.mxu0
      %v1328 = vadd.f32 0.0, %v1327
      %v1329 = vpop.f32.mrf.mxu0
      %v1330 = vadd.f32 0.0, %v1329
      %1331 = vdwg.mxu0
      %1332 = vmatprep.subr.bf16.mxu0 0
      %1333 = vmatpush1.bf16.msra.mxu0 0
      %1334 = vmatprep.subr.bf16.mxu0 0
      %1335 = vmatpush1.bf16.msra.mxu0 0
      %1336 = vmatprep.subr.bf16.mxu0 0
      %1337 = vmatpush1.bf16.msra.mxu0 0
      %1338 = vmatprep.subr.bf16.mxu0 0
      %1339 = vmatpush1.bf16.msra.mxu0 0
      %1340 = vmatprep.subr.bf16.mxu0 0
      %1341 = vmatpush1.bf16.msra.mxu0 0
      %1342 = vmatprep.subr.bf16.mxu0 0
      %1343 = vmatpush1.bf16.msra.mxu0 0
      %1344 = vmatprep.subr.bf16.mxu0 %v1235
      %1345 = vmatpush1.bf16.msra.mxu0 %v1234
      %1346 = vmatprep.subr.bf16.mxu0 %v1233
      %1347 = vmatpush1.bf16.msra.mxu0 %v1232
      %1348 = vmatprep.subr.bf16.mxu0 0
      %1349 = vmatpush2.bf16.msra.mxu0 0
      %1350 = vmatprep.subr.bf16.mxu0 0
      %1351 = vmatpush2.bf16.msra.mxu0 0
      %1352 = vmatprep.subr.bf16.mxu0 0
      %1353 = vmatpush2.bf16.msra.mxu0 0
      %1354 = vmatprep.subr.bf16.mxu0 0
      %1355 = vmatpush2.bf16.msra.mxu0 0
      %1356 = vmatprep.subr.bf16.mxu0 0
      %1357 = vmatpush2.bf16.msra.mxu0 0
      %1358 = vmatprep.subr.bf16.mxu0 0
      %1359 = vmatpush2.bf16.msra.mxu0 0
      %1360 = vmatprep.subr.bf16.mxu0 0
      %1361 = vmatpush2.bf16.msra.mxu0 0
      %1362 = vmatprep.subr.bf16.mxu0 0
      %1363 = vmatpush2.bf16.msra.mxu0 0
      %1364 = vmatprep.mubr.bf16.mxu0 0
      %1365 = vmatmul.mubr.bf16.gmra.mxu0 %v1274
      %v1366 = vpop.f32.mrf.mxu0
      %v1367 = vadd.f32 %v1314, %v1366
      %v1368 = vpop.f32.mrf.mxu0
      %v1369 = vadd.f32 %v1316, %v1368
      %v1370 = vpop.f32.mrf.mxu0
      %v1371 = vadd.f32 %v1318, %v1370
      %v1372 = vpop.f32.mrf.mxu0
      %v1373 = vadd.f32 %v1320, %v1372
      %1374 = vmatprep.mubr.bf16.mxu0 0
      %1375 = vmatmul.mubr.bf16.gmra.mxu0 %v1277
      %v1376 = vpop.f32.mrf.mxu0
      %v1377 = vadd.f32 %v1324, %v1376
      %v1378 = vpop.f32.mrf.mxu0
      %v1379 = vadd.f32 %v1326, %v1378
      %v1380 = vpop.f32.mrf.mxu0
      %v1381 = vadd.f32 %v1328, %v1380
      %v1382 = vpop.f32.mrf.mxu0
      %v1383 = vadd.f32 %v1330, %v1382
      %1384 = vdwg.mxu0
      %v1385 = vld [vmem:[%s3] sm:$0xff]
      %v1386 = vld [vmem:[%s3 + $0x8] sm:$0xff]
      %v1387 = vld [vmem:[%s3 + $0x10] sm:$0xff]
      %v1388 = vld [vmem:[%s3 + $0x18] sm:$0xff]
      %1390 = vset.pattern.permute.xlu0 0
      %1391 = vperm.xlu0 %1390, %v1385
      %v1392 = vpop.permute.xlu0 %1391
      %1395 = vset.pattern.permute.xlu0 0
      %1396 = vperm.xlu0 %1395, %v1386
      %v1397 = vpop.permute.xlu0 %1396
      %1400 = vset.pattern.permute.xlu0 0
      %1401 = vperm.xlu0 %1400, %v1387
      %v1402 = vpop.permute.xlu0 %1401
      %1405 = vset.pattern.permute.xlu0 0
      %1406 = vperm.xlu0 %1405, %v1388
      %v1407 = vpop.permute.xlu0 %1406
      %v1409 = vmul.f32 %v1367, %v1392
      %v1410 = vmul.f32 %v1369, %v1392
      %v1411 = vmul.f32 %v1371, %v1397
      %v1412 = vmul.f32 %v1373, %v1397
      %v1413 = vmul.f32 %v1377, %v1402
      %v1414 = vmul.f32 %v1379, %v1402
      %v1415 = vmul.f32 %v1381, %v1407
      %v1416 = vmul.f32 %v1383, %v1407
      %v1417 = vld [vmem:[%s4] sm:$0xff]
      %v1418 = vld [vmem:[%s4 + $0x8] sm:$0xff]
      %v1419 = vld [vmem:[%s4 + $0x10] sm:$0xff]
      %v1420 = vld [vmem:[%s4 + $0x18] sm:$0xff]
      %1422 = vset.pattern.permute.xlu0 0
      %1423 = vperm.xlu0 %1422, %v1417
      %v1424 = vpop.permute.xlu0 %1423
      %1427 = vset.pattern.permute.xlu0 0
      %1428 = vperm.xlu0 %1427, %v1418
      %v1429 = vpop.permute.xlu0 %1428
      %1432 = vset.pattern.permute.xlu0 0
      %1433 = vperm.xlu0 %1432, %v1419
      %v1434 = vpop.permute.xlu0 %1433
      %1437 = vset.pattern.permute.xlu0 0
      %1438 = vperm.xlu0 %1437, %v1420
      %v1439 = vpop.permute.xlu0 %1438
      %v1441 = vadd.f32 %v1409, %v1424
      %v1442 = vadd.f32 %v1410, %v1424
      %v1443 = vadd.f32 %v1411, %v1429
      %v1444 = vadd.f32 %v1412, %v1429
      %v1445 = vadd.f32 %v1413, %v1434
      %v1446 = vadd.f32 %v1414, %v1434
      %v1447 = vadd.f32 %v1415, %v1439
      %v1448 = vadd.f32 %v1416, %v1439
      %v1449 = vmax.f32 %v1441, 0.0
      %v1450 = vmax.f32 %v1442, 0.0
      %v1451 = vmax.f32 %v1443, 0.0
      %v1452 = vmax.f32 %v1444, 0.0
      %v1453 = vmax.f32 %v1445, 0.0
      %v1454 = vmax.f32 %v1446, 0.0
      %v1455 = vmax.f32 %v1447, 0.0
      %v1456 = vmax.f32 %v1448, 0.0
      %v1457 = vpack.c.bf16 %v1451, %v1449
      %v1458 = vpack.c.bf16 %v1452, %v1450
      %v1459 = vpack.c.bf16 %v1455, %v1453
      %v1460 = vpack.c.bf16 %v1456, %v1454
      %1465 = vrot.lane.b32.xlu0 %v1457, 17
      %v1466 = vpop.permute.xlu0 %1465
      %1467 = vrot.lane.b32.xlu0 %v1458, 17
      %v1468 = vpop.permute.xlu0 %1467
      %1469 = vrot.lane.b32.xlu0 %v1459, 17
      %v1470 = vpop.permute.xlu0 %1469
      %1471 = vrot.lane.b32.xlu0 %v1460, 17
      %v1472 = vpop.permute.xlu0 %1471
      %v1473 = vsel %vm391, %v1466, %v1468
      %v1474 = vsel %vm391, %v1470, %v1472
      %v1478 = vsel %vm396, 0, %v1466
      %v1481 = vsel %vm396, 0, %v1470
      %v1484 = vsel %vm396, %v1468, 0
      %v1487 = vsel %vm396, %v1472, 0
      %v1489 = vsel %vm420, %v1478, 0
      %v1490 = vsel %vm421, %v1473, 0
      %v1491 = vsel %vm420, %v1481, 0
      %v1492 = vsel %vm421, %v1474, 0
      %v1497 = vunpack.c.l.b16 %v1489
      %v1498 = vunpack.c.l.b16 %v1490
      %v1499 = vunpack.c.h.b16 %v1489
      %v1500 = vunpack.c.h.b16 %v1490
      %v1501 = vunpack.c.l.b16 %v1491
      %v1502 = vunpack.c.l.b16 %v1492
      %v1503 = vunpack.c.h.b16 %v1491
      %v1504 = vunpack.c.h.b16 %v1492
      %v1505 = vpack.c.b16 %v1498, %v1497
      %v1506 = vpack.c.b16 %v1500, %v1499
      %v1507 = vpack.c.b16 %v1502, %v1501
      %v1508 = vpack.c.b16 %v1504, %v1503
      %1513 = vst [vmem:[#allocation2] sm:$0xff] %v1505
      %1514 = vst [vmem:[#allocation2 + $0x8] sm:$0xff] %v1506
      %1515 = vst [vmem:[#allocation2 + $0x10] sm:$0xff] %v1507
      %1516 = vst [vmem:[#allocation2 + $0x18] sm:$0xff] %v1508
      %v1521 = vunpack.c.l.b16 %v1478
      %v1522 = vunpack.c.l.b16 %v1473
      %v1523 = vunpack.c.l.b16 %v1484
      %v1524 = vunpack.c.h.b16 %v1478
      %v1525 = vunpack.c.h.b16 %v1473
      %v1526 = vunpack.c.h.b16 %v1484
      %v1527 = vunpack.c.l.b16 %v1481
      %v1528 = vunpack.c.l.b16 %v1474
      %v1529 = vunpack.c.l.b16 %v1487
      %v1530 = vunpack.c.h.b16 %v1481
      %v1531 = vunpack.c.h.b16 %v1474
      %v1532 = vunpack.c.h.b16 %v1487
      %v1533 = vpack.c.b16 %v1522, %v1521
      %v1534 = vpack.c.b16 %v1523, %v1523
      %v1535 = vpack.c.b16 %v1525, %v1524
      %v1536 = vpack.c.b16 %v1526, %v1526
      %v1537 = vpack.c.b16 %v1528, %v1527
      %v1538 = vpack.c.b16 %v1529, %v1529
      %v1539 = vpack.c.b16 %v1531, %v1530
      %v1540 = vpack.c.b16 %v1532, %v1532
      %1541 = vrot.lane.b32.xlu0 %v1533, 127
      %v1542 = vpop.permute.xlu0 %1541
      %1543 = vrot.lane.b32.xlu0 %v1534, 127
      %v1544 = vpop.permute.xlu0 %1543
      %1545 = vrot.lane.b32.xlu0 %v1535, 127
      %v1546 = vpop.permute.xlu0 %1545
      %1547 = vrot.lane.b32.xlu0 %v1536, 127
      %v1548 = vpop.permute.xlu0 %1547
      %1549 = vrot.lane.b32.xlu0 %v1537, 127
      %v1550 = vpop.permute.xlu0 %1549
      %1551 = vrot.lane.b32.xlu0 %v1538, 127
      %v1552 = vpop.permute.xlu0 %1551
      %1553 = vrot.lane.b32.xlu0 %v1539, 127
      %v1554 = vpop.permute.xlu0 %1553
      %1555 = vrot.lane.b32.xlu0 %v1540, 127
      %v1556 = vpop.permute.xlu0 %1555
      %v1557 = vrot.slane %v1542, 4
      %v1558 = vrot.slane %v1544, 4
      %v1559 = vrot.slane %v1546, 4
      %v1560 = vrot.slane %v1548, 4
      %v1561 = vrot.slane %v1550, 4
      %v1562 = vrot.slane %v1552, 4
      %v1563 = vrot.slane %v1554, 4
      %v1564 = vrot.slane %v1556, 4
      %v1565 = vsel %vm498, %v1557, %v1558
      %v1566 = vsel %vm500, %v1542, %v1565
      %v1567 = vsel %vm498, %v1559, %v1560
      %v1568 = vsel %vm500, %v1546, %v1567
      %v1569 = vsel %vm498, %v1561, %v1562
      %v1570 = vsel %vm500, %v1550, %v1569
      %v1571 = vsel %vm498, %v1563, %v1564
      %v1572 = vsel %vm500, %v1554, %v1571
      %1577 = vst [vmem:[#allocation2 + $0x20] sm:$0xff] %v1566
      %1578 = vst [vmem:[#allocation2 + $0x28] sm:$0xff] %v1568
      %1579 = vst [vmem:[#allocation2 + $0x30] sm:$0xff] %v1570
      %1580 = vst [vmem:[#allocation2 + $0x38] sm:$0xff] %v1572
      %v1581 = vsel %vm532, %v1478, 0
      %v1582 = vsel %vm533, %v1473, 0
      %v1583 = vsel %vm534, %v1484, 0
      %v1584 = vsel %vm532, %v1481, 0
      %v1585 = vsel %vm533, %v1474, 0
      %v1586 = vsel %vm534, %v1487, 0
      %v1593 = vunpack.c.l.b16 %v1581
      %v1594 = vunpack.c.l.b16 %v1582
      %v1595 = vunpack.c.l.b16 %v1583
      %v1596 = vunpack.c.h.b16 %v1581
      %v1597 = vunpack.c.h.b16 %v1582
      %v1598 = vunpack.c.h.b16 %v1583
      %v1599 = vunpack.c.l.b16 %v1584
      %v1600 = vunpack.c.l.b16 %v1585
      %v1601 = vunpack.c.l.b16 %v1586
      %v1602 = vunpack.c.h.b16 %v1584
      %v1603 = vunpack.c.h.b16 %v1585
      %v1604 = vunpack.c.h.b16 %v1586
      %v1605 = vpack.c.b16 %v1594, %v1593
      %v1606 = vpack.c.b16 %v1595, %v1595
      %v1607 = vpack.c.b16 %v1597, %v1596
      %v1608 = vpack.c.b16 %v1598, %v1598
      %v1609 = vpack.c.b16 %v1600, %v1599
      %v1610 = vpack.c.b16 %v1601, %v1601
      %v1611 = vpack.c.b16 %v1603, %v1602
      %v1612 = vpack.c.b16 %v1604, %v1604
      %1613 = vrot.lane.b32.xlu0 %v1605, 126
      %v1614 = vpop.permute.xlu0 %1613
      %1615 = vrot.lane.b32.xlu0 %v1606, 126
      %v1616 = vpop.permute.xlu0 %1615
      %1617 = vrot.lane.b32.xlu0 %v1607, 126
      %v1618 = vpop.permute.xlu0 %1617
      %1619 = vrot.lane.b32.xlu0 %v1608, 126
      %v1620 = vpop.permute.xlu0 %1619
      %1621 = vrot.lane.b32.xlu0 %v1609, 126
      %v1622 = vpop.permute.xlu0 %1621
      %1623 = vrot.lane.b32.xlu0 %v1610, 126
      %v1624 = vpop.permute.xlu0 %1623
      %1625 = vrot.lane.b32.xlu0 %v1611, 126
      %v1626 = vpop.permute.xlu0 %1625
      %1627 = vrot.lane.b32.xlu0 %v1612, 126
      %v1628 = vpop.permute.xlu0 %1627
      %v1629 = vrot.slane %v1614, 4
      %v1630 = vrot.slane %v1616, 4
      %v1631 = vrot.slane %v1618, 4
      %v1632 = vrot.slane %v1620, 4
      %v1633 = vrot.slane %v1622, 4
      %v1634 = vrot.slane %v1624, 4
      %v1635 = vrot.slane %v1626, 4
      %v1636 = vrot.slane %v1628, 4
      %v1637 = vsel %vm498, %v1629, %v1630
      %v1638 = vsel %vm592, %v1614, %v1637
      %v1639 = vsel %vm498, %v1631, %v1632
      %v1640 = vsel %vm592, %v1618, %v1639
      %v1641 = vsel %vm498, %v1633, %v1634
      %v1642 = vsel %vm592, %v1622, %v1641
      %v1643 = vsel %vm498, %v1635, %v1636
      %v1644 = vsel %vm592, %v1626, %v1643
      %1649 = vst [vmem:[#allocation2 + $0x40] sm:$0xff] %v1638
      %1650 = vst [vmem:[#allocation2 + $0x48] sm:$0xff] %v1640
      %1651 = vst [vmem:[#allocation2 + $0x50] sm:$0xff] %v1642
      %1652 = vst [vmem:[#allocation2 + $0x58] sm:$0xff] %v1644
      %v1653 = vsel %vm614, %v1478, 0
      %v1654 = vsel %vm615, %v1473, 0
      %v1655 = vsel %vm616, %v1484, 0
      %v1656 = vsel %vm614, %v1481, 0
      %v1657 = vsel %vm615, %v1474, 0
      %v1658 = vsel %vm616, %v1487, 0
      %v1665 = vunpack.c.l.b16 %v1653
      %v1666 = vunpack.c.l.b16 %v1654
      %v1667 = vunpack.c.l.b16 %v1655
      %v1668 = vunpack.c.h.b16 %v1653
      %v1669 = vunpack.c.h.b16 %v1654
      %v1670 = vunpack.c.h.b16 %v1655
      %v1671 = vunpack.c.l.b16 %v1656
      %v1672 = vunpack.c.l.b16 %v1657
      %v1673 = vunpack.c.l.b16 %v1658
      %v1674 = vunpack.c.h.b16 %v1656
      %v1675 = vunpack.c.h.b16 %v1657
      %v1676 = vunpack.c.h.b16 %v1658
      %v1677 = vpack.c.b16 %v1666, %v1665
      %v1678 = vpack.c.b16 %v1667, %v1667
      %v1679 = vpack.c.b16 %v1669, %v1668
      %v1680 = vpack.c.b16 %v1670, %v1670
      %v1681 = vpack.c.b16 %v1672, %v1671
      %v1682 = vpack.c.b16 %v1673, %v1673
      %v1683 = vpack.c.b16 %v1675, %v1674
      %v1684 = vpack.c.b16 %v1676, %v1676
      %1685 = vrot.lane.b32.xlu0 %v1677, 112
      %v1686 = vpop.permute.xlu0 %1685
      %1687 = vrot.lane.b32.xlu0 %v1678, 112
      %v1688 = vpop.permute.xlu0 %1687
      %1689 = vrot.lane.b32.xlu0 %v1679, 112
      %v1690 = vpop.permute.xlu0 %1689
      %1691 = vrot.lane.b32.xlu0 %v1680, 112
      %v1692 = vpop.permute.xlu0 %1691
      %1693 = vrot.lane.b32.xlu0 %v1681, 112
      %v1694 = vpop.permute.xlu0 %1693
      %1695 = vrot.lane.b32.xlu0 %v1682, 112
      %v1696 = vpop.permute.xlu0 %1695
      %1697 = vrot.lane.b32.xlu0 %v1683, 112
      %v1698 = vpop.permute.xlu0 %1697
      %1699 = vrot.lane.b32.xlu0 %v1684, 112
      %v1700 = vpop.permute.xlu0 %1699
      %v1701 = vrot.slane %v1686, 4
      %v1702 = vrot.slane %v1688, 4
      %v1703 = vrot.slane %v1690, 4
      %v1704 = vrot.slane %v1692, 4
      %v1705 = vrot.slane %v1694, 4
      %v1706 = vrot.slane %v1696, 4
      %v1707 = vrot.slane %v1698, 4
      %v1708 = vrot.slane %v1700, 4
      %v1709 = vsel %vm498, %v1701, %v1702
      %v1710 = vsel %vm674, %v1686, %v1709
      %v1711 = vsel %vm498, %v1703, %v1704
      %v1712 = vsel %vm674, %v1690, %v1711
      %v1713 = vsel %vm498, %v1705, %v1706
      %v1714 = vsel %vm674, %v1694, %v1713
      %v1715 = vsel %vm498, %v1707, %v1708
      %v1716 = vsel %vm674, %v1698, %v1715
      %1721 = vst [vmem:[#allocation2 + $0x60] sm:$0xff] %v1710
      %1722 = vst [vmem:[#allocation2 + $0x68] sm:$0xff] %v1712
      %1723 = vst [vmem:[#allocation2 + $0x70] sm:$0xff] %v1714
      %1724 = vst [vmem:[#allocation2 + $0x78] sm:$0xff] %v1716
      %1725 = vrot.lane.b32.xlu0 %v1533, 111
      %v1726 = vpop.permute.xlu0 %1725
      %1727 = vrot.lane.b32.xlu0 %v1534, 111
      %v1728 = vpop.permute.xlu0 %1727
      %1729 = vrot.lane.b32.xlu0 %v1535, 111
      %v1730 = vpop.permute.xlu0 %1729
      %1731 = vrot.lane.b32.xlu0 %v1536, 111
      %v1732 = vpop.permute.xlu0 %1731
      %1733 = vrot.lane.b32.xlu0 %v1537, 111
      %v1734 = vpop.permute.xlu0 %1733
      %1735 = vrot.lane.b32.xlu0 %v1538, 111
      %v1736 = vpop.permute.xlu0 %1735
      %1737 = vrot.lane.b32.xlu0 %v1539, 111
      %v1738 = vpop.permute.xlu0 %1737
      %1739 = vrot.lane.b32.xlu0 %v1540, 111
      %v1740 = vpop.permute.xlu0 %1739
      %v1741 = vrot.slane %v1726, 4
      %v1742 = vrot.slane %v1728, 4
      %v1743 = vrot.slane %v1730, 4
      %v1744 = vrot.slane %v1732, 4
      %v1745 = vrot.slane %v1734, 4
      %v1746 = vrot.slane %v1736, 4
      %v1747 = vrot.slane %v1738, 4
      %v1748 = vrot.slane %v1740, 4
      %v1749 = vsel %vm498, %v1741, %v1742
      %v1750 = vsel %vm715, %v1726, %v1749
      %v1751 = vsel %vm498, %v1743, %v1744
      %v1752 = vsel %vm715, %v1730, %v1751
      %v1753 = vsel %vm498, %v1745, %v1746
      %v1754 = vsel %vm715, %v1734, %v1753
      %v1755 = vsel %vm498, %v1747, %v1748
      %v1756 = vsel %vm715, %v1738, %v1755
      %1761 = vst [vmem:[#allocation2 + $0x80] sm:$0xff] %v1750
      %1762 = vst [vmem:[#allocation2 + $0x88] sm:$0xff] %v1752
      %1763 = vst [vmem:[#allocation2 + $0x90] sm:$0xff] %v1754
      %1764 = vst [vmem:[#allocation2 + $0x98] sm:$0xff] %v1756
      %v1765 = vsel %vm737, %v1478, 0
      %v1766 = vsel %vm738, %v1473, 0
      %v1767 = vsel %vm739, %v1484, 0
      %v1768 = vsel %vm737, %v1481, 0
      %v1769 = vsel %vm738, %v1474, 0
      %v1770 = vsel %vm739, %v1487, 0
      %v1777 = vunpack.c.l.b16 %v1765
      %v1778 = vunpack.c.l.b16 %v1766
      %v1779 = vunpack.c.l.b16 %v1767
      %v1780 = vunpack.c.h.b16 %v1765
      %v1781 = vunpack.c.h.b16 %v1766
      %v1782 = vunpack.c.h.b16 %v1767
      %v1783 = vunpack.c.l.b16 %v1768
      %v1784 = vunpack.c.l.b16 %v1769
      %v1785 = vunpack.c.l.b16 %v1770
      %v1786 = vunpack.c.h.b16 %v1768
      %v1787 = vunpack.c.h.b16 %v1769
      %v1788 = vunpack.c.h.b16 %v1770
      %v1789 = vpack.c.b16 %v1778, %v1777
      %v1790 = vpack.c.b16 %v1779, %v1779
      %v1791 = vpack.c.b16 %v1781, %v1780
      %v1792 = vpack.c.b16 %v1782, %v1782
      %v1793 = vpack.c.b16 %v1784, %v1783
      %v1794 = vpack.c.b16 %v1785, %v1785
      %v1795 = vpack.c.b16 %v1787, %v1786
      %v1796 = vpack.c.b16 %v1788, %v1788
      %1797 = vrot.lane.b32.xlu0 %v1789, 110
      %v1798 = vpop.permute.xlu0 %1797
      %1799 = vrot.lane.b32.xlu0 %v1790, 110
      %v1800 = vpop.permute.xlu0 %1799
      %1801 = vrot.lane.b32.xlu0 %v1791, 110
      %v1802 = vpop.permute.xlu0 %1801
      %1803 = vrot.lane.b32.xlu0 %v1792, 110
      %v1804 = vpop.permute.xlu0 %1803
      %1805 = vrot.lane.b32.xlu0 %v1793, 110
      %v1806 = vpop.permute.xlu0 %1805
      %1807 = vrot.lane.b32.xlu0 %v1794, 110
      %v1808 = vpop.permute.xlu0 %1807
      %1809 = vrot.lane.b32.xlu0 %v1795, 110
      %v1810 = vpop.permute.xlu0 %1809
      %1811 = vrot.lane.b32.xlu0 %v1796, 110
      %v1812 = vpop.permute.xlu0 %1811
      %v1813 = vrot.slane %v1798, 4
      %v1814 = vrot.slane %v1800, 4
      %v1815 = vrot.slane %v1802, 4
      %v1816 = vrot.slane %v1804, 4
      %v1817 = vrot.slane %v1806, 4
      %v1818 = vrot.slane %v1808, 4
      %v1819 = vrot.slane %v1810, 4
      %v1820 = vrot.slane %v1812, 4
      %v1821 = vsel %vm498, %v1813, %v1814
      %v1822 = vsel %vm797, %v1798, %v1821
      %v1823 = vsel %vm498, %v1815, %v1816
      %v1824 = vsel %vm797, %v1802, %v1823
      %v1825 = vsel %vm498, %v1817, %v1818
      %v1826 = vsel %vm797, %v1806, %v1825
      %v1827 = vsel %vm498, %v1819, %v1820
      %v1828 = vsel %vm797, %v1810, %v1827
      %1833 = vst [vmem:[#allocation2 + $0xa0] sm:$0xff] %v1822
      %1834 = vst [vmem:[#allocation2 + $0xa8] sm:$0xff] %v1824
      %1835 = vst [vmem:[#allocation2 + $0xb0] sm:$0xff] %v1826
      %1836 = vst [vmem:[#allocation2 + $0xb8] sm:$0xff] %v1828
      %v1837 = vsel %vm819, %v1478, 0
      %v1838 = vsel %vm820, %v1473, 0
      %v1839 = vsel %vm821, %v1484, 0
      %v1840 = vsel %vm819, %v1481, 0
      %v1841 = vsel %vm820, %v1474, 0
      %v1842 = vsel %vm821, %v1487, 0
      %v1849 = vunpack.c.l.b16 %v1837
      %v1850 = vunpack.c.l.b16 %v1838
      %v1851 = vunpack.c.l.b16 %v1839
      %v1852 = vunpack.c.h.b16 %v1837
      %v1853 = vunpack.c.h.b16 %v1838
      %v1854 = vunpack.c.h.b16 %v1839
      %v1855 = vunpack.c.l.b16 %v1840
      %v1856 = vunpack.c.l.b16 %v1841
      %v1857 = vunpack.c.l.b16 %v1842
      %v1858 = vunpack.c.h.b16 %v1840
      %v1859 = vunpack.c.h.b16 %v1841
      %v1860 = vunpack.c.h.b16 %v1842
      %v1861 = vpack.c.b16 %v1850, %v1849
      %v1862 = vpack.c.b16 %v1851, %v1851
      %v1863 = vpack.c.b16 %v1853, %v1852
      %v1864 = vpack.c.b16 %v1854, %v1854
      %v1865 = vpack.c.b16 %v1856, %v1855
      %v1866 = vpack.c.b16 %v1857, %v1857
      %v1867 = vpack.c.b16 %v1859, %v1858
      %v1868 = vpack.c.b16 %v1860, %v1860
      %1869 = vrot.lane.b32.xlu0 %v1861, 96
      %v1870 = vpop.permute.xlu0 %1869
      %1871 = vrot.lane.b32.xlu0 %v1862, 96
      %v1872 = vpop.permute.xlu0 %1871
      %1873 = vrot.lane.b32.xlu0 %v1863, 96
      %v1874 = vpop.permute.xlu0 %1873
      %1875 = vrot.lane.b32.xlu0 %v1864, 96
      %v1876 = vpop.permute.xlu0 %1875
      %1877 = vrot.lane.b32.xlu0 %v1865, 96
      %v1878 = vpop.permute.xlu0 %1877
      %1879 = vrot.lane.b32.xlu0 %v1866, 96
      %v1880 = vpop.permute.xlu0 %1879
      %1881 = vrot.lane.b32.xlu0 %v1867, 96
      %v1882 = vpop.permute.xlu0 %1881
      %1883 = vrot.lane.b32.xlu0 %v1868, 96
      %v1884 = vpop.permute.xlu0 %1883
      %v1885 = vrot.slane %v1870, 4
      %v1886 = vrot.slane %v1872, 4
      %v1887 = vrot.slane %v1874, 4
      %v1888 = vrot.slane %v1876, 4
      %v1889 = vrot.slane %v1878, 4
      %v1890 = vrot.slane %v1880, 4
      %v1891 = vrot.slane %v1882, 4
      %v1892 = vrot.slane %v1884, 4
      %v1893 = vsel %vm498, %v1885, %v1886
      %v1894 = vsel %vm879, %v1870, %v1893
      %v1895 = vsel %vm498, %v1887, %v1888
      %v1896 = vsel %vm879, %v1874, %v1895
      %v1897 = vsel %vm498, %v1889, %v1890
      %v1898 = vsel %vm879, %v1878, %v1897
      %v1899 = vsel %vm498, %v1891, %v1892
      %v1900 = vsel %vm879, %v1882, %v1899
      %1905 = vst [vmem:[#allocation2 + $0xc0] sm:$0xff] %v1894
      %1906 = vst [vmem:[#allocation2 + $0xc8] sm:$0xff] %v1896
      %1907 = vst [vmem:[#allocation2 + $0xd0] sm:$0xff] %v1898
      %1908 = vst [vmem:[#allocation2 + $0xd8] sm:$0xff] %v1900
      %1909 = vrot.lane.b32.xlu0 %v1533, 95
      %v1910 = vpop.permute.xlu0 %1909
      %1911 = vrot.lane.b32.xlu0 %v1534, 95
      %v1912 = vpop.permute.xlu0 %1911
      %1913 = vrot.lane.b32.xlu0 %v1535, 95
      %v1914 = vpop.permute.xlu0 %1913
      %1915 = vrot.lane.b32.xlu0 %v1536, 95
      %v1916 = vpop.permute.xlu0 %1915
      %1917 = vrot.lane.b32.xlu0 %v1537, 95
      %v1918 = vpop.permute.xlu0 %1917
      %1919 = vrot.lane.b32.xlu0 %v1538, 95
      %v1920 = vpop.permute.xlu0 %1919
      %1921 = vrot.lane.b32.xlu0 %v1539, 95
      %v1922 = vpop.permute.xlu0 %1921
      %1923 = vrot.lane.b32.xlu0 %v1540, 95
      %v1924 = vpop.permute.xlu0 %1923
      %v1925 = vrot.slane %v1910, 4
      %v1926 = vrot.slane %v1912, 4
      %v1927 = vrot.slane %v1914, 4
      %v1928 = vrot.slane %v1916, 4
      %v1929 = vrot.slane %v1918, 4
      %v1930 = vrot.slane %v1920, 4
      %v1931 = vrot.slane %v1922, 4
      %v1932 = vrot.slane %v1924, 4
      %v1933 = vsel %vm498, %v1925, %v1926
      %v1934 = vsel %vm920, %v1910, %v1933
      %v1935 = vsel %vm498, %v1927, %v1928
      %v1936 = vsel %vm920, %v1914, %v1935
      %v1937 = vsel %vm498, %v1929, %v1930
      %v1938 = vsel %vm920, %v1918, %v1937
      %v1939 = vsel %vm498, %v1931, %v1932
      %v1940 = vsel %vm920, %v1922, %v1939
      %1945 = vst [vmem:[#allocation2 + $0xe0] sm:$0xff] %v1934
      %1946 = vst [vmem:[#allocation2 + $0xe8] sm:$0xff] %v1936
      %1947 = vst [vmem:[#allocation2 + $0xf0] sm:$0xff] %v1938
      %1948 = vst [vmem:[#allocation2 + $0xf8] sm:$0xff] %v1940
      %v1949 = vsel %vm942, %v1478, 0
      %v1950 = vsel %vm943, %v1473, 0
      %v1951 = vsel %vm944, %v1484, 0
      %v1952 = vsel %vm942, %v1481, 0
      %v1953 = vsel %vm943, %v1474, 0
      %v1954 = vsel %vm944, %v1487, 0
      %v1961 = vunpack.c.l.b16 %v1949
      %v1962 = vunpack.c.l.b16 %v1950
      %v1963 = vunpack.c.l.b16 %v1951
      %v1964 = vunpack.c.h.b16 %v1949
      %v1965 = vunpack.c.h.b16 %v1950
      %v1966 = vunpack.c.h.b16 %v1951
      %v1967 = vunpack.c.l.b16 %v1952
      %v1968 = vunpack.c.l.b16 %v1953
      %v1969 = vunpack.c.l.b16 %v1954
      %v1970 = vunpack.c.h.b16 %v1952
      %v1971 = vunpack.c.h.b16 %v1953
      %v1972 = vunpack.c.h.b16 %v1954
      %v1973 = vpack.c.b16 %v1962, %v1961
      %v1974 = vpack.c.b16 %v1963, %v1963
      %v1975 = vpack.c.b16 %v1965, %v1964
      %v1976 = vpack.c.b16 %v1966, %v1966
      %v1977 = vpack.c.b16 %v1968, %v1967
      %v1978 = vpack.c.b16 %v1969, %v1969
      %v1979 = vpack.c.b16 %v1971, %v1970
      %v1980 = vpack.c.b16 %v1972, %v1972
      %1981 = vrot.lane.b32.xlu0 %v1973, 94
      %v1982 = vpop.permute.xlu0 %1981
      %1983 = vrot.lane.b32.xlu0 %v1974, 94
      %v1984 = vpop.permute.xlu0 %1983
      %1985 = vrot.lane.b32.xlu0 %v1975, 94
      %v1986 = vpop.permute.xlu0 %1985
      %1987 = vrot.lane.b32.xlu0 %v1976, 94
      %v1988 = vpop.permute.xlu0 %1987
      %1989 = vrot.lane.b32.xlu0 %v1977, 94
      %v1990 = vpop.permute.xlu0 %1989
      %1991 = vrot.lane.b32.xlu0 %v1978, 94
      %v1992 = vpop.permute.xlu0 %1991
      %1993 = vrot.lane.b32.xlu0 %v1979, 94
      %v1994 = vpop.permute.xlu0 %1993
      %1995 = vrot.lane.b32.xlu0 %v1980, 94
      %v1996 = vpop.permute.xlu0 %1995
      %v1997 = vrot.slane %v1982, 4
      %v1998 = vrot.slane %v1984, 4
      %v1999 = vrot.slane %v1986, 4
      %v2000 = vrot.slane %v1988, 4
      %v2001 = vrot.slane %v1990, 4
      %v2002 = vrot.slane %v1992, 4
      %v2003 = vrot.slane %v1994, 4
      %v2004 = vrot.slane %v1996, 4
      %v2005 = vsel %vm498, %v1997, %v1998
      %v2006 = vsel %vm1002, %v1982, %v2005
      %v2007 = vsel %vm498, %v1999, %v2000
      %v2008 = vsel %vm1002, %v1986, %v2007
      %v2009 = vsel %vm498, %v2001, %v2002
      %v2010 = vsel %vm1002, %v1990, %v2009
      %v2011 = vsel %vm498, %v2003, %v2004
      %v2012 = vsel %vm1002, %v1994, %v2011
      %2017 = vst [vmem:[#allocation2 + $0x100] sm:$0xff] %v2006
      %2018 = vst [vmem:[#allocation2 + $0x108] sm:$0xff] %v2008
      %2019 = vst [vmem:[#allocation2 + $0x110] sm:$0xff] %v2010
      %2020 = vst [vmem:[#allocation2 + $0x118] sm:$0xff] %v2012
      %v2021 = vld [vmem:[%s2] sm:$0xff]
      %v2022 = vld [vmem:[%s2 + $0x8] sm:$0xf]
      %v2023 = vld [vmem:[%s2 + $0xc] sm:$0xff]
      %v2024 = vld [vmem:[%s2 + $0x14] sm:$0xf]
      %v2025 = vld [vmem:[%s2 + $0x18] sm:$0xff]
      %v2026 = vld [vmem:[%s2 + $0x20] sm:$0xf]
      %v2027 = vld [vmem:[%s2 + $0x24] sm:$0xff]
      %v2028 = vld [vmem:[%s2 + $0x2c] sm:$0xf]
      %v2029 = vld [vmem:[#allocation2] sm:$0xff]
      %v2030 = vld [vmem:[#allocation2 + $0x8] sm:$0xff]
      %v2031 = vld [vmem:[#allocation2 + $0x10] sm:$0xff]
      %v2032 = vld [vmem:[#allocation2 + $0x18] sm:$0xff]
      %v2033 = vld [vmem:[#allocation2 + $0x20] sm:$0xff]
      %v2034 = vld [vmem:[#allocation2 + $0x28] sm:$0xff]
      %v2035 = vld [vmem:[#allocation2 + $0x30] sm:$0xff]
      %v2036 = vld [vmem:[#allocation2 + $0x38] sm:$0xff]
      %v2037 = vld [vmem:[#allocation2 + $0x40] sm:$0xff]
      %v2038 = vld [vmem:[#allocation2 + $0x48] sm:$0xff]
      %v2039 = vld [vmem:[#allocation2 + $0x50] sm:$0xff]
      %v2040 = vld [vmem:[#allocation2 + $0x58] sm:$0xff]
      %v2041 = vld [vmem:[#allocation2 + $0x60] sm:$0xff]
      %v2042 = vld [vmem:[#allocation2 + $0x68] sm:$0xff]
      %v2043 = vld [vmem:[#allocation2 + $0x70] sm:$0xff]
      %v2044 = vld [vmem:[#allocation2 + $0x78] sm:$0xff]
      %v2045 = vld [vmem:[#allocation2 + $0x80] sm:$0xff]
      %v2046 = vld [vmem:[#allocation2 + $0x88] sm:$0xff]
      %v2047 = vld [vmem:[#allocation2 + $0x90] sm:$0xff]
      %v2048 = vld [vmem:[#allocation2 + $0x98] sm:$0xff]
      %v2049 = vld [vmem:[#allocation2 + $0xa0] sm:$0xff]
      %v2050 = vld [vmem:[#allocation2 + $0xa8] sm:$0xff]
      %v2051 = vld [vmem:[#allocation2 + $0xb0] sm:$0xff]
      %v2052 = vld [vmem:[#allocation2 + $0xb8] sm:$0xff]
      %v2053 = vld [vmem:[#allocation2 + $0xc0] sm:$0xff]
      %v2054 = vld [vmem:[#allocation2 + $0xc8] sm:$0xff]
      %v2055 = vld [vmem:[#allocation2 + $0xd0] sm:$0xff]
      %v2056 = vld [vmem:[#allocation2 + $0xd8] sm:$0xff]
      %v2057 = vld [vmem:[#allocation2 + $0xe0] sm:$0xff]
      %v2058 = vld [vmem:[#allocation2 + $0xe8] sm:$0xff]
      %v2059 = vld [vmem:[#allocation2 + $0xf0] sm:$0xff]
      %v2060 = vld [vmem:[#allocation2 + $0xf8] sm:$0xff]
      %v2061 = vld [vmem:[#allocation2 + $0x100] sm:$0xff]
      %v2062 = vld [vmem:[#allocation2 + $0x108] sm:$0xff]
      %v2063 = vld [vmem:[#allocation2 + $0x110] sm:$0xff]
      %v2064 = vld [vmem:[#allocation2 + $0x118] sm:$0xff]
      %v2073 = vunpack.c.l.b16 %v2021
      %v2074 = vunpack.c.h.b16 %v2021
      %v2075 = vunpack.c.l.b16 %v2022
      %v2076 = vunpack.c.l.b16 %v2023
      %v2077 = vunpack.c.h.b16 %v2023
      %v2078 = vunpack.c.l.b16 %v2024
      %v2079 = vunpack.c.l.b16 %v2025
      %v2080 = vunpack.c.h.b16 %v2025
      %v2081 = vunpack.c.l.b16 %v2026
      %v2082 = vunpack.c.l.b16 %v2027
      %v2083 = vunpack.c.h.b16 %v2027
      %v2084 = vunpack.c.l.b16 %v2028
      %v2085 = vpack.c.b16 %v2076, %v2073
      %v2086 = vpack.c.b16 %v2077, %v2074
      %v2087 = vpack.c.b16 %v2078, %v2075
      %v2088 = vpack.c.b16 %v2082, %v2079
      %v2089 = vpack.c.b16 %v2083, %v2080
      %v2090 = vpack.c.b16 %v2084, %v2081
      %v2131 = vunpack.c.l.b16 %v2029
      %v2132 = vunpack.c.h.b16 %v2029
      %v2133 = vunpack.c.l.b16 %v2030
      %v2134 = vunpack.c.h.b16 %v2030
      %v2135 = vunpack.c.l.b16 %v2031
      %v2136 = vunpack.c.h.b16 %v2031
      %v2137 = vunpack.c.l.b16 %v2032
      %v2138 = vunpack.c.h.b16 %v2032
      %v2139 = vunpack.c.l.b16 %v2033
      %v2140 = vunpack.c.h.b16 %v2033
      %v2141 = vunpack.c.l.b16 %v2034
      %v2142 = vunpack.c.h.b16 %v2034
      %v2143 = vunpack.c.l.b16 %v2035
      %v2144 = vunpack.c.h.b16 %v2035
      %v2145 = vunpack.c.l.b16 %v2036
      %v2146 = vunpack.c.h.b16 %v2036
      %v2147 = vunpack.c.l.b16 %v2037
      %v2148 = vunpack.c.h.b16 %v2037
      %v2149 = vunpack.c.l.b16 %v2038
      %v2150 = vunpack.c.h.b16 %v2038
      %v2151 = vunpack.c.l.b16 %v2039
      %v2152 = vunpack.c.h.b16 %v2039
      %v2153 = vunpack.c.l.b16 %v2040
      %v2154 = vunpack.c.h.b16 %v2040
      %v2155 = vunpack.c.l.b16 %v2041
      %v2156 = vunpack.c.h.b16 %v2041
      %v2157 = vunpack.c.l.b16 %v2042
      %v2158 = vunpack.c.h.b16 %v2042
      %v2159 = vunpack.c.l.b16 %v2043
      %v2160 = vunpack.c.h.b16 %v2043
      %v2161 = vunpack.c.l.b16 %v2044
      %v2162 = vunpack.c.h.b16 %v2044
      %v2163 = vunpack.c.l.b16 %v2045
      %v2164 = vunpack.c.h.b16 %v2045
      %v2165 = vunpack.c.l.b16 %v2046
      %v2166 = vunpack.c.h.b16 %v2046
      %v2167 = vunpack.c.l.b16 %v2047
      %v2168 = vunpack.c.h.b16 %v2047
      %v2169 = vunpack.c.l.b16 %v2048
      %v2170 = vunpack.c.h.b16 %v2048
      %v2171 = vunpack.c.l.b16 %v2049
      %v2172 = vunpack.c.h.b16 %v2049
      %v2173 = vunpack.c.l.b16 %v2050
      %v2174 = vunpack.c.h.b16 %v2050
      %v2175 = vunpack.c.l.b16 %v2051
      %v2176 = vunpack.c.h.b16 %v2051
      %v2177 = vunpack.c.l.b16 %v2052
      %v2178 = vunpack.c.h.b16 %v2052
      %v2179 = vunpack.c.l.b16 %v2053
      %v2180 = vunpack.c.h.b16 %v2053
      %v2181 = vunpack.c.l.b16 %v2054
      %v2182 = vunpack.c.h.b16 %v2054
      %v2183 = vunpack.c.l.b16 %v2055
      %v2184 = vunpack.c.h.b16 %v2055
      %v2185 = vunpack.c.l.b16 %v2056
      %v2186 = vunpack.c.h.b16 %v2056
      %v2187 = vunpack.c.l.b16 %v2057
      %v2188 = vunpack.c.h.b16 %v2057
      %v2189 = vunpack.c.l.b16 %v2058
      %v2190 = vunpack.c.h.b16 %v2058
      %v2191 = vunpack.c.l.b16 %v2059
      %v2192 = vunpack.c.h.b16 %v2059
      %v2193 = vunpack.c.l.b16 %v2060
      %v2194 = vunpack.c.h.b16 %v2060
      %v2195 = vunpack.c.l.b16 %v2061
      %v2196 = vunpack.c.h.b16 %v2061
      %v2197 = vunpack.c.l.b16 %v2062
      %v2198 = vunpack.c.h.b16 %v2062
      %v2199 = vunpack.c.l.b16 %v2063
      %v2200 = vunpack.c.h.b16 %v2063
      %v2201 = vunpack.c.l.b16 %v2064
      %v2202 = vunpack.c.h.b16 %v2064
      %v2203 = vpack.c.b16 %v2133, %v2131
      %v2204 = vpack.c.b16 %v2134, %v2132
      %v2205 = vpack.c.b16 %v2137, %v2135
      %v2206 = vpack.c.b16 %v2138, %v2136
      %v2207 = vpack.c.b16 %v2141, %v2139
      %v2208 = vpack.c.b16 %v2142, %v2140
      %v2209 = vpack.c.b16 %v2145, %v2143
      %v2210 = vpack.c.b16 %v2146, %v2144
      %v2211 = vpack.c.b16 %v2149, %v2147
      %v2212 = vpack.c.b16 %v2150, %v2148
      %v2213 = vpack.c.b16 %v2153, %v2151
      %v2214 = vpack.c.b16 %v2154, %v2152
      %v2215 = vpack.c.b16 %v2157, %v2155
      %v2216 = vpack.c.b16 %v2158, %v2156
      %v2217 = vpack.c.b16 %v2161, %v2159
      %v2218 = vpack.c.b16 %v2162, %v2160
      %v2219 = vpack.c.b16 %v2165, %v2163
      %v2220 = vpack.c.b16 %v2166, %v2164
      %v2221 = vpack.c.b16 %v2169, %v2167
      %v2222 = vpack.c.b16 %v2170, %v2168
      %v2223 = vpack.c.b16 %v2173, %v2171
      %v2224 = vpack.c.b16 %v2174, %v2172
      %v2225 = vpack.c.b16 %v2177, %v2175
      %v2226 = vpack.c.b16 %v2178, %v2176
      %v2227 = vpack.c.b16 %v2181, %v2179
      %v2228 = vpack.c.b16 %v2182, %v2180
      %v2229 = vpack.c.b16 %v2185, %v2183
      %v2230 = vpack.c.b16 %v2186, %v2184
      %v2231 = vpack.c.b16 %v2189, %v2187
      %v2232 = vpack.c.b16 %v2190, %v2188
      %v2233 = vpack.c.b16 %v2193, %v2191
      %v2234 = vpack.c.b16 %v2194, %v2192
      %v2235 = vpack.c.b16 %v2197, %v2195
      %v2236 = vpack.c.b16 %v2198, %v2196
      %v2237 = vpack.c.b16 %v2201, %v2199
      %v2238 = vpack.c.b16 %v2202, %v2200
      %v2276 = vsel %vm1272, %v2087, 0
      %v2279 = vsel %vm1272, %v2090, 0
      %2281 = vmatprep.subr.bf16.mxu0 %v2218
      %2282 = vmatpush1.bf16.msra.mxu0 %v2217
      %2283 = vmatprep.subr.bf16.mxu0 %v2216
      %2284 = vmatpush1.bf16.msra.mxu0 %v2215
      %2285 = vmatprep.subr.bf16.mxu0 %v2214
      %2286 = vmatpush1.bf16.msra.mxu0 %v2213
      %2287 = vmatprep.subr.bf16.mxu0 %v2212
      %2288 = vmatpush1.bf16.msra.mxu0 %v2211
      %2289 = vmatprep.subr.bf16.mxu0 %v2210
      %2290 = vmatpush1.bf16.msra.mxu0 %v2209
      %2291 = vmatprep.subr.bf16.mxu0 %v2208
      %2292 = vmatpush1.bf16.msra.mxu0 %v2207
      %2293 = vmatprep.subr.bf16.mxu0 %v2206
      %2294 = vmatpush1.bf16.msra.mxu0 %v2205
      %2295 = vmatprep.subr.bf16.mxu0 %v2204
      %2296 = vmatpush1.bf16.msra.mxu0 %v2203
      %2297 = vmatprep.subr.bf16.mxu0 %v2234
      %2298 = vmatpush2.bf16.msra.mxu0 %v2233
      %2299 = vmatprep.subr.bf16.mxu0 %v2232
      %2300 = vmatpush2.bf16.msra.mxu0 %v2231
      %2301 = vmatprep.subr.bf16.mxu0 %v2230
      %2302 = vmatpush2.bf16.msra.mxu0 %v2229
      %2303 = vmatprep.subr.bf16.mxu0 %v2228
      %2304 = vmatpush2.bf16.msra.mxu0 %v2227
      %2305 = vmatprep.subr.bf16.mxu0 %v2226
      %2306 = vmatpush2.bf16.msra.mxu0 %v2225
      %2307 = vmatprep.subr.bf16.mxu0 %v2224
      %2308 = vmatpush2.bf16.msra.mxu0 %v2223
      %2309 = vmatprep.subr.bf16.mxu0 %v2222
      %2310 = vmatpush2.bf16.msra.mxu0 %v2221
      %2311 = vmatprep.subr.bf16.mxu0 %v2220
      %2312 = vmatpush2.bf16.msra.mxu0 %v2219
      %2313 = vmatprep.mubr.bf16.mxu0 %v2086
      %2314 = vmatmul.mubr.bf16.gmra.mxu0 %v2085
      %v2315 = vpop.f32.mrf.mxu0
      %v2316 = vadd.f32 0.0, %v2315
      %v2317 = vpop.f32.mrf.mxu0
      %v2318 = vadd.f32 0.0, %v2317
      %v2319 = vpop.f32.mrf.mxu0
      %v2320 = vadd.f32 0.0, %v2319
      %v2321 = vpop.f32.mrf.mxu0
      %v2322 = vadd.f32 0.0, %v2321
      %2323 = vmatprep.mubr.bf16.mxu0 %v2089
      %2324 = vmatmul.mubr.bf16.gmra.mxu0 %v2088
      %v2325 = vpop.f32.mrf.mxu0
      %v2326 = vadd.f32 0.0, %v2325
      %v2327 = vpop.f32.mrf.mxu0
      %v2328 = vadd.f32 0.0, %v2327
      %v2329 = vpop.f32.mrf.mxu0
      %v2330 = vadd.f32 0.0, %v2329
      %v2331 = vpop.f32.mrf.mxu0
      %v2332 = vadd.f32 0.0, %v2331
      %2333 = vdwg.mxu0
      %2334 = vmatprep.subr.bf16.mxu0 0
      %2335 = vmatpush1.bf16.msra.mxu0 0
      %2336 = vmatprep.subr.bf16.mxu0 0
      %2337 = vmatpush1.bf16.msra.mxu0 0
      %2338 = vmatprep.subr.bf16.mxu0 0
      %2339 = vmatpush1.bf16.msra.mxu0 0
      %2340 = vmatprep.subr.bf16.mxu0 0
      %2341 = vmatpush1.bf16.msra.mxu0 0
      %2342 = vmatprep.subr.bf16.mxu0 0
      %2343 = vmatpush1.bf16.msra.mxu0 0
      %2344 = vmatprep.subr.bf16.mxu0 0
      %2345 = vmatpush1.bf16.msra.mxu0 0
      %2346 = vmatprep.subr.bf16.mxu0 %v2238
      %2347 = vmatpush1.bf16.msra.mxu0 %v2237
      %2348 = vmatprep.subr.bf16.mxu0 %v2236
      %2349 = vmatpush1.bf16.msra.mxu0 %v2235
      %2350 = vmatprep.subr.bf16.mxu0 0
      %2351 = vmatpush2.bf16.msra.mxu0 0
      %2352 = vmatprep.subr.bf16.mxu0 0
      %2353 = vmatpush2.bf16.msra.mxu0 0
      %2354 = vmatprep.subr.bf16.mxu0 0
      %2355 = vmatpush2.bf16.msra.mxu0 0
      %2356 = vmatprep.subr.bf16.mxu0 0
      %2357 = vmatpush2.bf16.msra.mxu0 0
      %2358 = vmatprep.subr.bf16.mxu0 0
      %2359 = vmatpush2.bf16.msra.mxu0 0
      %2360 = vmatprep.subr.bf16.mxu0 0
      %2361 = vmatpush2.bf16.msra.mxu0 0
      %2362 = vmatprep.subr.bf16.mxu0 0
      %2363 = vmatpush2.bf16.msra.mxu0 0
      %2364 = vmatprep.subr.bf16.mxu0 0
      %2365 = vmatpush2.bf16.msra.mxu0 0
      %2366 = vmatprep.mubr.bf16.mxu0 0
      %2367 = vmatmul.mubr.bf16.gmra.mxu0 %v2276
      %v2368 = vpop.f32.mrf.mxu0
      %v2369 = vadd.f32 %v2316, %v2368
      %v2370 = vpop.f32.mrf.mxu0
      %v2371 = vadd.f32 %v2318, %v2370
      %v2372 = vpop.f32.mrf.mxu0
      %v2373 = vadd.f32 %v2320, %v2372
      %v2374 = vpop.f32.mrf.mxu0
      %v2375 = vadd.f32 %v2322, %v2374
      %2376 = vmatprep.mubr.bf16.mxu0 0
      %2377 = vmatmul.mubr.bf16.gmra.mxu0 %v2279
      %v2378 = vpop.f32.mrf.mxu0
      %v2379 = vadd.f32 %v2326, %v2378
      %v2380 = vpop.f32.mrf.mxu0
      %v2381 = vadd.f32 %v2328, %v2380
      %v2382 = vpop.f32.mrf.mxu0
      %v2383 = vadd.f32 %v2330, %v2382
      %v2384 = vpop.f32.mrf.mxu0
      %v2385 = vadd.f32 %v2332, %v2384
      %2386 = vdwg.mxu0
      %v2387 = vld [vmem:[%s5] sm:$0xff]
      %v2388 = vld [vmem:[%s5 + $0x8] sm:$0xff]
      %v2389 = vld [vmem:[%s5 + $0x10] sm:$0xff]
      %v2390 = vld [vmem:[%s5 + $0x18] sm:$0xff]
      %2392 = vset.pattern.permute.xlu0 0
      %2393 = vperm.xlu0 %2392, %v2387
      %v2394 = vpop.permute.xlu0 %2393
      %2397 = vset.pattern.permute.xlu0 0
      %2398 = vperm.xlu0 %2397, %v2388
      %v2399 = vpop.permute.xlu0 %2398
      %2402 = vset.pattern.permute.xlu0 0
      %2403 = vperm.xlu0 %2402, %v2389
      %v2404 = vpop.permute.xlu0 %2403
      %2407 = vset.pattern.permute.xlu0 0
      %2408 = vperm.xlu0 %2407, %v2390
      %v2409 = vpop.permute.xlu0 %2408
      %v2411 = vmul.f32 %v2369, %v2394
      %v2412 = vmul.f32 %v2371, %v2394
      %v2413 = vmul.f32 %v2373, %v2399
      %v2414 = vmul.f32 %v2375, %v2399
      %v2415 = vmul.f32 %v2379, %v2404
      %v2416 = vmul.f32 %v2381, %v2404
      %v2417 = vmul.f32 %v2383, %v2409
      %v2418 = vmul.f32 %v2385, %v2409
      %v2419 = vld [vmem:[%s6] sm:$0xff]
      %v2420 = vld [vmem:[%s6 + $0x8] sm:$0xff]
      %v2421 = vld [vmem:[%s6 + $0x10] sm:$0xff]
      %v2422 = vld [vmem:[%s6 + $0x18] sm:$0xff]
      %2424 = vset.pattern.permute.xlu0 0
      %2425 = vperm.xlu0 %2424, %v2419
      %v2426 = vpop.permute.xlu0 %2425
      %2429 = vset.pattern.permute.xlu0 0
      %2430 = vperm.xlu0 %2429, %v2420
      %v2431 = vpop.permute.xlu0 %2430
      %2434 = vset.pattern.permute.xlu0 0
      %2435 = vperm.xlu0 %2434, %v2421
      %v2436 = vpop.permute.xlu0 %2435
      %2439 = vset.pattern.permute.xlu0 0
      %2440 = vperm.xlu0 %2439, %v2422
      %v2441 = vpop.permute.xlu0 %2440
      %v2443 = vadd.f32 %v2411, %v2426
      %v2444 = vadd.f32 %v2412, %v2426
      %v2445 = vadd.f32 %v2413, %v2431
      %v2446 = vadd.f32 %v2414, %v2431
      %v2447 = vadd.f32 %v2415, %v2436
      %v2448 = vadd.f32 %v2416, %v2436
      %v2449 = vadd.f32 %v2417, %v2441
      %v2450 = vadd.f32 %v2418, %v2441
      %v2451 = vadd.f32 %v2443, %v2444
      %2452 = vadd.xlane.f32.xlu0 %v2451
      %v2453 = vpop.xlane.xlu0 %2452
      %v2454 = vadd.f32 %v2445, %v2446
      %2455 = vadd.xlane.f32.xlu0 %v2454
      %v2456 = vpop.xlane.xlu0 %2455
      %v2457 = vadd.f32 %v2447, %v2448
      %2458 = vadd.xlane.f32.xlu0 %v2457
      %v2459 = vpop.xlane.xlu0 %2458
      %v2460 = vadd.f32 %v2449, %v2450
      %2461 = vadd.xlane.f32.xlu0 %v2460
      %v2462 = vpop.xlane.xlu0 %2461
      %v2463 = vrcp.pop 256.0
      %v2464 = vmul.f32 %v2453, %v2463
      %v2465 = vmul.f32 %v2456, %v2463
      %v2466 = vmul.f32 %v2459, %v2463
      %v2467 = vmul.f32 %v2462, %v2463
      %v2468 = vld [vmem:[%s7] sm:$0xff]
      %v2469 = vld [vmem:[%s7 + $0x8] sm:$0xff]
      %v2470 = vld [vmem:[%s7 + $0x10] sm:$0xff]
      %v2471 = vld [vmem:[%s7 + $0x18] sm:$0xff]
      %v2472 = vmul.f32 %v2468, %v2464
      %v2473 = vmul.f32 %v2469, %v2465
      %v2474 = vmul.f32 %v2470, %v2466
      %v2475 = vmul.f32 %v2471, %v2467
      %vm2476 = vcmask 15360
      %v2477 = vsel %vm2476, %v2472, 0.0
      %v2478 = vsel %vm2476, %v2473, 0.0
      %v2479 = vadd.f32 %v2477, %v2478
      %v2480 = vsel %vm2476, %v2474, 0.0
      %v2481 = vadd.f32 %v2479, %v2480
      %v2482 = vsel %vm2476, %v2475, 0.0
      %v2483 = vadd.f32 %v2481, %v2482
      %v2484 = vrot.slane %v2483, 4
      %v2485 = vadd.f32 %v2483, %v2484
      %v2486 = vrot.slane %v2485, 2
      %v2487 = vadd.f32 %v2485, %v2486
      %v2488 = vrot.slane %v2487, 1
      %v2489 = vadd.f32 %v2487, %v2488
      %v2490 = vmax.f32 %v2489, 0.0
      %v2491 = vld [vmem:[%s8] sm:$0xff]
      %v2492 = vld [vmem:[%s8 + $0x8] sm:$0xff]
      %v2493 = vld [vmem:[%s8 + $0x10] sm:$0xff]
      %v2494 = vld [vmem:[%s8 + $0x18] sm:$0xff]
      %v2495 = vmul.f32 %v2491, %v2490
      %v2496 = vmul.f32 %v2492, %v2490
      %v2497 = vmul.f32 %v2493, %v2490
      %v2498 = vmul.f32 %v2494, %v2490
      %v2499 = vsel %vm2476, %v2495, 0.0
      %2500 = vadd.xlane.f32.xlu0 %v2499
      %v2501 = vpop.xlane.xlu0 %2500
      %v2502 = vsel %vm2476, %v2496, 0.0
      %2503 = vadd.xlane.f32.xlu0 %v2502
      %v2504 = vpop.xlane.xlu0 %2503
      %v2505 = vsel %vm2476, %v2497, 0.0
      %2506 = vadd.xlane.f32.xlu0 %v2505
      %v2507 = vpop.xlane.xlu0 %2506
      %v2508 = vsel %vm2476, %v2498, 0.0
      %2509 = vadd.xlane.f32.xlu0 %v2508
      %v2510 = vpop.xlane.xlu0 %2509
      %v2511 = vsub.f32 0.0, %v2501
      %v2512 = vsub.f32 0.0, %v2504
      %v2513 = vsub.f32 0.0, %v2507
      %v2514 = vsub.f32 0.0, %v2510
      %v2515 = vmul.f32 %v2511, 1.442695
      %v2516 = vpow.pop %v2515
      %v2517 = vmul.f32 %v2512, 1.442695
      %v2518 = vpow.pop %v2517
      %v2519 = vmul.f32 %v2513, 1.442695
      %v2520 = vpow.pop %v2519
      %v2521 = vmul.f32 %v2514, 1.442695
      %v2522 = vpow.pop %v2521
      %v2523 = vadd.f32 %v2516, 1.0
      %v2524 = vadd.f32 %v2518, 1.0
      %v2525 = vadd.f32 %v2520, 1.0
      %v2526 = vadd.f32 %v2522, 1.0
      %v2527 = vrcp.pop %v2523
      %v2528 = vrcp.pop %v2524
      %v2529 = vrcp.pop %v2525
      %v2530 = vrcp.pop %v2526
      %v2531 = vmul.f32 %v2443, %v2527
      %v2532 = vmul.f32 %v2444, %v2527
      %v2533 = vmul.f32 %v2445, %v2528
      %v2534 = vmul.f32 %v2446, %v2528
      %v2535 = vmul.f32 %v2447, %v2529
      %v2536 = vmul.f32 %v2448, %v2529
      %v2537 = vmul.f32 %v2449, %v2530
      %v2538 = vmul.f32 %v2450, %v2530
      %v2539 = vadd.f32 %v2531, %v367
      %v2540 = vadd.f32 %v2532, %v368
      %v2541 = vadd.f32 %v2533, %v369
      %v2542 = vadd.f32 %v2534, %v370
      %v2543 = vadd.f32 %v2535, %v371
      %v2544 = vadd.f32 %v2536, %v372
      %v2545 = vadd.f32 %v2537, %v373
      %v2546 = vadd.f32 %v2538, %v374
      %v2547 = vmax.f32 %v2539, 0.0
      %v2548 = vmax.f32 %v2540, 0.0
      %v2549 = vmax.f32 %v2541, 0.0
      %v2550 = vmax.f32 %v2542, 0.0
      %v2551 = vmax.f32 %v2543, 0.0
      %v2552 = vmax.f32 %v2544, 0.0
      %v2553 = vmax.f32 %v2545, 0.0
      %v2554 = vmax.f32 %v2546, 0.0
      %2555 = vst [vmem:[%s332] sm:$0xff] %v2547
      %2556 = vst [vmem:[%s332 + $0x8] sm:$0xff] %v2548
      %2557 = vst [vmem:[%s332 + $0x10] sm:$0xff] %v2549
      %2558 = vst [vmem:[%s332 + $0x18] sm:$0xff] %v2550
      %2559 = vst [vmem:[%s332 + $0x20] sm:$0xff] %v2551
      %2560 = vst [vmem:[%s332 + $0x28] sm:$0xff] %v2552
      %2561 = vst [vmem:[%s332 + $0x30] sm:$0xff] %v2553
      %2562 = vst [vmem:[%s332 + $0x38] sm:$0xff] %v2554
      %p2563 = scmp.lt.s32.totalorder %s20, 1
      %s2564 = scalar_select %p2563, %s20, 1
      %s2565 = smul.addr %s2564, 8
      %s2566 = smul.addr %s2565, 8
      %s2567 = scalar_lea.vmem %s9, %s2566
      // Predicated region
      $region57: #{se_basic_block_forward.1} parent=55 // pred_check
        %p2568 = pneg %p232
      $region58: #{se_basic_block_forward.1} parent=55 // pred_check_branch
        %2570 = sbr.rel (%p2568) target = $region60
      $region59: #{se_basic_block_forward.1} parent=55 // pred_region
        _
      $region60: #{se_basic_block_forward.1} parent=55 // pred_fallthru
        _
    $region56: #{se_basic_block_forward.1} parent=5 // pred_fallthru
      _
    %p2571 = scmp.le.s32.totalorder 2, %s15
    // Predicated region
    $region61: #{se_basic_block_forward.1} parent=5 // pred_check
      %p2572 = pneg %p2571
    $region62: #{se_basic_block_forward.1} parent=5 // pred_check_branch
      %2574 = sbr.rel (%p2572) target = $region64
    $region63: #{se_basic_block_forward.1} parent=5 // pred_region
      %s2575 = ssub.s32 %s15, 2
      // Predicated region
      $region65: #{se_basic_block_forward.1} parent=63 // pred_check
        %p2576 = pneg %p238
      $region66: #{se_basic_block_forward.1} parent=63 // pred_check_branch
        %2578 = sbr.rel (%p2576) target = $region68
      $region67: #{se_basic_block_forward.1} parent=63 // pred_region
        %p2579 = scmp.lt.s32.totalorder %s21, 1
        %s2580 = scalar_select %p2579, %s21, 1
        %s2581 = smul.addr %s2580, 8
        %s2582 = smul.addr %s2581, 8
        %s2583 = scalar_lea.vmem %s9, %s2582
      $region68: #{se_basic_block_forward.1} parent=63 // pred_fallthru
        _
    $region64: #{se_basic_block_forward.1} parent=5 // pred_fallthru
      _
  $region6: #{se_basic_block_forward.1} parent=0 // loop_footer
    %s19 = sadd.s32 1, %s15
  $region7: #{se_basic_block_forward.1} parent=0 // loop_footer_branch
    %14 = sbr.rel target = $region3
  $region8: #{se_basic_block_forward.1} parent=0 // loop_exit
    _

</llo_original>
